<compile_context>
chip_gen: v6e
topology: v6e:2x2x1
jax: 0.10.0
libtpu: 0.0.40
codegen_flags: <defaults>
</compile_context>

<pallas_src>
import functools

import jax
import jax.numpy as jnp
from jax.experimental import pallas as pl
from jax.experimental.pallas import tpu as pltpu


def _round_up(v, m):
    return (v + m - 1) // m * m


def _pad_to(a, shape):
    return jnp.pad(a, [(0, t - s) for s, t in zip(a.shape, shape)])


_LAYERS = ("enc1", "enc2", "enc3", "z", "dec1", "dec2", "dec3", "xbar")


def make_ae_kernel(true_widths, offsets, compute_dtype):
    """Build the fused-forward kernel for one batch tile.

    true_widths / offsets describe where each kept activation lives inside the
    single packed output buffer (compute order: h1, h2, h3, z, x_bar).
    """
    w_h1, w_h2, w_h3, w_z, w_xb = true_widths
    o_h1, o_h2, o_h3, o_z, o_xb = offsets
    cdt = compute_dtype

    def kernel(x_ref,
               w1_ref, b1_ref, w2_ref, b2_ref, w3_ref, b3_ref,
               wz_ref, bz_ref,
               wd1_ref, bd1_ref, wd2_ref, bd2_ref, wd3_ref, bd3_ref,
               wx_ref, bx_ref,
               out_ref):
        def linear(h, w_ref, b_ref, relu):
            # h is already in the MXU compute dtype; accumulate in f32.
            y = jnp.dot(h, w_ref[...], preferred_element_type=jnp.float32)
            y = y + b_ref[...]
            return jnp.maximum(y, 0.0) if relu else y

        def store(y, off, width):
            # Store only the true (unpadded) columns into the packed buffer.
            out_ref[:, off:off + width] = y[:, :width].astype(out_ref.dtype)

        x = x_ref[...]
        # ---- Encoder: store each kept activation right after it is computed
        # (keeps the live set to ~1 activation -> no vreg spills at large bm).
        h1 = linear(x, w1_ref, b1_ref, relu=True)
        store(h1, o_h1, w_h1)
        h2 = linear(h1.astype(cdt), w2_ref, b2_ref, relu=True)
        store(h2, o_h2, w_h2)
        h3 = linear(h2.astype(cdt), w3_ref, b3_ref, relu=True)
        store(h3, o_h3, w_h3)
        z = linear(h3.astype(cdt), wz_ref, bz_ref, relu=False)
        store(z, o_z, w_z)
        # ---- Decoder: intermediates are never returned -> keep them in the
        # compute dtype (bf16 on the perf path) to halve vreg footprint.
        d1 = linear(z.astype(cdt), wd1_ref, bd1_ref, relu=True).astype(cdt)
        d2 = linear(d1, wd2_ref, bd2_ref, relu=True).astype(cdt)
        d3 = linear(d2, wd3_ref, bd3_ref, relu=True).astype(cdt)
        x_bar = linear(d3, wx_ref, bx_ref, relu=False)
        store(x_bar, o_xb, w_xb)

    return kernel


def ae_forward(x, params, *, block_m=512, compute_dtype=jnp.bfloat16, lane=128):
    """params: dict with w_* as (in, out) and b_* as (1, out).

    Returns (x_bar, enc_h1, enc_h2, enc_h3, z) in the original (unpadded)
    shapes, dtype of x.  block_m=512 is a good default on v5e/v6e; on v7x the
    wrapper automatically splits the batch into >=2 grid steps when possible
    so the "parallel" grid axis shards across both TensorCores.
    """
    n, n_input = x.shape
    out_dtype = x.dtype

    # --- pad feature dims to 128 lanes; cast MXU operands to compute_dtype.
    # Zero padding is numerically transparent (zero weight rows/cols, zero
    # bias entries); padded output columns are never stored.
    ordered = []
    padded_weights = []
    for name in _LAYERS:
        w = params[f"w_{name}"]
        b = params[f"b_{name}"]
        fi, fo = w.shape
        fi_p, fo_p = _round_up(fi, lane), _round_up(fo, lane)
        ordered += [_pad_to(w, (fi_p, fo_p)).astype(compute_dtype),
                    _pad_to(b, (1, fo_p)).astype(jnp.float32)]
        padded_weights.append(ordered[-2])

    n_input_p = padded_weights[0].shape[0]

    # --- packed output layout (compute order: h1, h2, h3, z, x_bar).
    true_widths = (params["w_enc1"].shape[1], params["w_enc2"].shape[1],
                   params["w_enc3"].shape[1], params["w_z"].shape[1], n_input)
    offsets = []
    off = 0
    for w_ in true_widths:
        offsets.append(off)
        off += int(w_)
    total_w_p = _round_up(off, lane)

    # --- batch tiling: big tiles, but keep >=2 grid steps when possible so
    # the "parallel" axis can shard across v7x's two TensorCores.
    n8 = _round_up(n, 8)
    bm = _round_up(max(8, min(block_m, n8)), 8)
    if n8 >= 16 and n8 <= bm:
        bm = _round_up((n8 + 1) // 2, 8)
    n_pad = _round_up(n, bm)
    grid = (n_pad // bm,)

    x_p = _pad_to(x, (n_pad, n_input_p)).astype(compute_dtype)

    kernel = make_ae_kernel(true_widths, tuple(offsets), compute_dtype)

    in_specs = [pl.BlockSpec((bm, n_input_p), lambda i: (i, 0))]
    # Grid-invariant weight/bias blocks: whole array, constant index map
    # (never re-DMA'd across grid steps).
    in_specs += [pl.BlockSpec(a.shape, lambda i: (0, 0)) for a in ordered]
    out_specs = pl.BlockSpec((bm, total_w_p), lambda i: (i, 0))
    out_shape = jax.ShapeDtypeStruct((n_pad, total_w_p), out_dtype)

    c_item = jnp.dtype(compute_dtype).itemsize
    o_item = jnp.dtype(out_dtype).itemsize
    const_bytes = sum(int(a.size) * jnp.dtype(a.dtype).itemsize for a in ordered)
    cost = pl.CostEstimate(
        flops=2 * n_pad * sum(int(w.shape[0]) * int(w.shape[1])
                              for w in padded_weights),
        transcendentals=0,
        bytes_accessed=(int(x_p.size) * c_item + const_bytes
                        + n_pad * total_w_p * o_item),
    )

    # Tight VMEM budget: per-step tiles (double-buffered) + constants + slack.
    tile_bytes = bm * n_input_p * c_item + bm * total_w_p * o_item
    vmem_limit = int(min(48 * 1024 * 1024,
                         max(16 * 1024 * 1024,
                             2 * (const_bytes + tile_bytes) + 4 * 1024 * 1024)))

    out = pl.pallas_call(
        kernel,
        out_shape=out_shape,
        grid_spec=pltpu.PrefetchScalarGridSpec(
            num_scalar_prefetch=0,
            grid=grid,
            in_specs=in_specs,
            out_specs=out_specs,
        ),
        compiler_params=pltpu.CompilerParams(
            dimension_semantics=("parallel",),
            vmem_limit_bytes=vmem_limit,
        ),
        cost_estimate=cost,
    )(x_p, *ordered)

    # Slice the packed buffer back into the five outputs (drop batch padding
    # and the lane-padding tail).
    segs = [out[:n, o:o + w] for o, w in zip(offsets, true_widths)]
    h1, h2, h3, z, x_bar = segs
    return x_bar, h1, h2, h3, z


def init_params(key, n_enc_1, n_enc_2, n_enc_3, n_dec_1, n_dec_2, n_dec_3,
                n_input, n_z, dtype=jnp.float32):
    """Deterministic synthetic params. Weights stored as (in, out)."""
    dims = [
        ("enc1", n_input, n_enc_1),
        ("enc2", n_enc_1, n_enc_2),
        ("enc3", n_enc_2, n_enc_3),
        ("z",    n_enc_3, n_z),
        ("dec1", n_z,     n_dec_1),
        ("dec2", n_dec_1, n_dec_2),
        ("dec3", n_dec_2, n_dec_3),
        ("xbar", n_dec_3, n_input),
    ]
    params = {}
    keys = jax.random.split(key, 2 * len(dims))
    for idx, (name, fan_in, fan_out) in enumerate(dims):
        wk, bk = keys[2 * idx], keys[2 * idx + 1]
        scale = 1.0 / jnp.sqrt(jnp.asarray(fan_in, dtype))
        params[f"w_{name}"] = (
            jax.random.uniform(wk, (fan_in, fan_out), dtype, -1.0, 1.0) * scale)
        params[f"b_{name}"] = (
            jax.random.uniform(bk, (1, fan_out), dtype, -1.0, 1.0) * scale)
    return params


def ae_reference(x, params):
    """Pure-JAX reference mirroring the PyTorch forward."""
    relu = jax.nn.relu
    h1 = relu(x @ params["w_enc1"] + params["b_enc1"])
    h2 = relu(h1 @ params["w_enc2"] + params["b_enc2"])
    h3 = relu(h2 @ params["w_enc3"] + params["b_enc3"])
    z = h3 @ params["w_z"] + params["b_z"]
    d1 = relu(z @ params["w_dec1"] + params["b_dec1"])
    d2 = relu(d1 @ params["w_dec2"] + params["b_dec2"])
    d3 = relu(d2 @ params["w_dec3"] + params["b_dec3"])
    x_bar = d3 @ params["w_xbar"] + params["b_xbar"]
    return x_bar, h1, h2, h3, z


if __name__ == "__main__":
    # Small, shape-consistent config (SDCN-style AE, scaled down).
    n_input, n_z = 32, 16
    n_enc_1, n_enc_2, n_enc_3 = 64, 64, 128
    n_dec_1, n_dec_2, n_dec_3 = 128, 64, 64
    batch = 256  # default block_m clamps to bm=128 -> grid=(2,) (v7x megacore)

    key = jax.random.PRNGKey(0)
    kx, kp = jax.random.split(key)
    x = jax.random.normal(kx, (batch, n_input), jnp.float32)
    params = init_params(kp, n_enc_1, n_enc_2, n_enc_3,
                         n_dec_1, n_dec_2, n_dec_3, n_input, n_z)

    refs = ae_reference(x, params)
    names = ("x_bar", "enc_h1", "enc_h2", "enc_h3", "z")

    # 1) f32-operand check: lane/batch zero-padding and the packed output
    #    layout must be numerically transparent.  (Uses default jnp.dot
    #    precision; tolerance covers TPU's f32->bf16-pass decomposition.)
    outs_f32 = jax.block_until_ready(
        ae_forward(x, params, compute_dtype=jnp.float32))
    for name, got, ref in zip(names, outs_f32, refs):
        assert got.shape == ref.shape, (name, got.shape, ref.shape)
        err = float(jnp.max(jnp.abs(got - ref)))
        assert err < 2e-4, (name, err)

    # 2) performance path (bf16 MXU operands + bf16 decoder intermediates,
    #    f32 accumulation): loose tolerance since input precision is reduced.
    outs = jax.block_until_ready(ae_forward(x, params))
    for name, got, ref in zip(names, outs, refs):
        assert got.shape == ref.shape, (name, got.shape, ref.shape)
        err = float(jnp.max(jnp.abs(got - ref)))
        tol = 5e-2 * (float(jnp.max(jnp.abs(ref))) + 1.0)
        assert err < tol, (name, err, tol)

    print("KERNEL_OK")
</pallas_src>

<mosaic_0001>
module attributes {stable_mosaic.version = 11 : i64} {
  func.func @kernel(%arg0: i32, %arg1: memref<128x128xf32, #tpu.memory_space<vmem>>, %arg2: memref<128x128xf32, #tpu.memory_space<vmem>>, %arg3: memref<1x128xf32, #tpu.memory_space<vmem>>, %arg4: memref<128x128xf32, #tpu.memory_space<vmem>>, %arg5: memref<1x128xf32, #tpu.memory_space<vmem>>, %arg6: memref<128x128xf32, #tpu.memory_space<vmem>>, %arg7: memref<1x128xf32, #tpu.memory_space<vmem>>, %arg8: memref<128x128xf32, #tpu.memory_space<vmem>>, %arg9: memref<1x128xf32, #tpu.memory_space<vmem>>, %arg10: memref<128x128xf32, #tpu.memory_space<vmem>>, %arg11: memref<1x128xf32, #tpu.memory_space<vmem>>, %arg12: memref<128x128xf32, #tpu.memory_space<vmem>>, %arg13: memref<1x128xf32, #tpu.memory_space<vmem>>, %arg14: memref<128x128xf32, #tpu.memory_space<vmem>>, %arg15: memref<1x128xf32, #tpu.memory_space<vmem>>, %arg16: memref<128x128xf32, #tpu.memory_space<vmem>>, %arg17: memref<1x128xf32, #tpu.memory_space<vmem>>, %arg18: memref<128x384xf32, #tpu.memory_space<vmem>>) attributes {dimension_semantics = [#tpu.dimension_semantics<parallel>], iteration_bounds = array<i64: 2>, scalar_prefetch = 0 : i64, scratch_operands = 0 : i64, tpu.core_type = #tpu.core_type<tc>, window_params = [{transform_indices = @transform_0, window_bounds = array<i64: 128, 128>}, {pipeline_mode = #tpu.pipeline_mode<synchronous>, transform_indices = @transform_1, window_bounds = array<i64: 128, 128>}, {pipeline_mode = #tpu.pipeline_mode<synchronous>, transform_indices = @transform_2, window_bounds = array<i64: 1, 128>}, {pipeline_mode = #tpu.pipeline_mode<synchronous>, transform_indices = @transform_3, window_bounds = array<i64: 128, 128>}, {pipeline_mode = #tpu.pipeline_mode<synchronous>, transform_indices = @transform_4, window_bounds = array<i64: 1, 128>}, {pipeline_mode = #tpu.pipeline_mode<synchronous>, transform_indices = @transform_5, window_bounds = array<i64: 128, 128>}, {pipeline_mode = #tpu.pipeline_mode<synchronous>, transform_indices = @transform_6, window_bounds = array<i64: 1, 128>}, {pipeline_mode = #tpu.pipeline_mode<synchronous>, transform_indices = @transform_7, window_bounds = array<i64: 128, 128>}, {pipeline_mode = #tpu.pipeline_mode<synchronous>, transform_indices = @transform_8, window_bounds = array<i64: 1, 128>}, {pipeline_mode = #tpu.pipeline_mode<synchronous>, transform_indices = @transform_9, window_bounds = array<i64: 128, 128>}, {pipeline_mode = #tpu.pipeline_mode<synchronous>, transform_indices = @transform_10, window_bounds = array<i64: 1, 128>}, {pipeline_mode = #tpu.pipeline_mode<synchronous>, transform_indices = @transform_11, window_bounds = array<i64: 128, 128>}, {pipeline_mode = #tpu.pipeline_mode<synchronous>, transform_indices = @transform_12, window_bounds = array<i64: 1, 128>}, {pipeline_mode = #tpu.pipeline_mode<synchronous>, transform_indices = @transform_13, window_bounds = array<i64: 128, 128>}, {pipeline_mode = #tpu.pipeline_mode<synchronous>, transform_indices = @transform_14, window_bounds = array<i64: 1, 128>}, {pipeline_mode = #tpu.pipeline_mode<synchronous>, transform_indices = @transform_15, window_bounds = array<i64: 128, 128>}, {pipeline_mode = #tpu.pipeline_mode<synchronous>, transform_indices = @transform_16, window_bounds = array<i64: 1, 128>}, {transform_indices = @transform_17, window_bounds = array<i64: 128, 384>}]} {
    %c0 = arith.constant 0 : index
    %c0_0 = arith.constant 0 : index
    %0 = vector.load %arg1[%c0, %c0_0] : memref<128x128xf32, #tpu.memory_space<vmem>>, vector<128x128xf32>
    %c0_1 = arith.constant 0 : index
    %c0_2 = arith.constant 0 : index
    %1 = vector.load %arg2[%c0_1, %c0_2] : memref<128x128xf32, #tpu.memory_space<vmem>>, vector<128x128xf32>
    %cst = arith.constant dense<0.000000e+00> : vector<128x128xf32>
    %2 = tpu.matmul %0, %1, %cst {dimension_numbers = #tpu.dot_dimension_numbers<[1], [0], [0], [1], [0, 0, 1, 1], [], []>} : vector<128x128xf32>, vector<128x128xf32>, vector<128x128xf32> -> vector<128x128xf32>
    %c0_3 = arith.constant 0 : index
    %c0_4 = arith.constant 0 : index
    %3 = vector.load %arg3[%c0_3, %c0_4] : memref<1x128xf32, #tpu.memory_space<vmem>>, vector<1x128xf32>
    %4 = vector.broadcast %3 : vector<1x128xf32> to vector<128x128xf32>
    %5 = arith.addf %2, %4 : vector<128x128xf32>
    %cst_5 = arith.constant 0.000000e+00 : f32
    %6 = vector.broadcast %cst_5 : f32 to vector<128x128xf32>
    %7 = arith.maximumf %5, %6 : vector<128x128xf32>
    %8 = vector.extract_strided_slice %7 {offsets = [0, 0], sizes = [128, 64], strides = [1, 1]} : vector<128x128xf32> to vector<128x64xf32>
    %c0_6 = arith.constant 0 : index
    %c0_7 = arith.constant 0 : index
    %9 = vector.load %arg18[%c0_6, %c0_7] : memref<128x384xf32, #tpu.memory_space<vmem>>, vector<128x64xf32>
    tpu.vector_store %arg18[%c0_6, %c0_7], %8 {strides = array<i32>} : memref<128x384xf32, #tpu.memory_space<vmem>>, vector<128x64xf32>,
    %c0_8 = arith.constant 0 : index
    %c0_9 = arith.constant 0 : index
    %10 = vector.load %arg4[%c0_8, %c0_9] : memref<128x128xf32, #tpu.memory_space<vmem>>, vector<128x128xf32>
    %cst_10 = arith.constant dense<0.000000e+00> : vector<128x128xf32>
    %11 = tpu.matmul %7, %10, %cst_10 {dimension_numbers = #tpu.dot_dimension_numbers<[1], [0], [0], [1], [0, 0, 1, 1], [], []>} : vector<128x128xf32>, vector<128x128xf32>, vector<128x128xf32> -> vector<128x128xf32>
    %c0_11 = arith.constant 0 : index
    %c0_12 = arith.constant 0 : index
    %12 = vector.load %arg5[%c0_11, %c0_12] : memref<1x128xf32, #tpu.memory_space<vmem>>, vector<1x128xf32>
    %13 = vector.broadcast %12 : vector<1x128xf32> to vector<128x128xf32>
    %14 = arith.addf %11, %13 : vector<128x128xf32>
    %cst_13 = arith.constant 0.000000e+00 : f32
    %15 = vector.broadcast %cst_13 : f32 to vector<128x128xf32>
    %16 = arith.maximumf %14, %15 : vector<128x128xf32>
    %17 = vector.extract_strided_slice %16 {offsets = [0, 0], sizes = [128, 64], strides = [1, 1]} : vector<128x128xf32> to vector<128x64xf32>
    %c0_14 = arith.constant 0 : index
    %c64 = arith.constant 64 : index
    %18 = vector.load %arg18[%c0_14, %c64] : memref<128x384xf32, #tpu.memory_space<vmem>>, vector<128x64xf32>
    tpu.vector_store %arg18[%c0_14, %c64], %17 {strides = array<i32>} : memref<128x384xf32, #tpu.memory_space<vmem>>, vector<128x64xf32>,
    %c0_15 = arith.constant 0 : index
    %c0_16 = arith.constant 0 : index
    %19 = vector.load %arg6[%c0_15, %c0_16] : memref<128x128xf32, #tpu.memory_space<vmem>>, vector<128x128xf32>
    %cst_17 = arith.constant dense<0.000000e+00> : vector<128x128xf32>
    %20 = tpu.matmul %16, %19, %cst_17 {dimension_numbers = #tpu.dot_dimension_numbers<[1], [0], [0], [1], [0, 0, 1, 1], [], []>} : vector<128x128xf32>, vector<128x128xf32>, vector<128x128xf32> -> vector<128x128xf32>
    %c0_18 = arith.constant 0 : index
    %c0_19 = arith.constant 0 : index
    %21 = vector.load %arg7[%c0_18, %c0_19] : memref<1x128xf32, #tpu.memory_space<vmem>>, vector<1x128xf32>
    %22 = vector.broadcast %21 : vector<1x128xf32> to vector<128x128xf32>
    %23 = arith.addf %20, %22 : vector<128x128xf32>
    %cst_20 = arith.constant 0.000000e+00 : f32
    %24 = vector.broadcast %cst_20 : f32 to vector<128x128xf32>
    %25 = arith.maximumf %23, %24 : vector<128x128xf32>
    %c0_21 = arith.constant 0 : index
    %c128 = arith.constant 128 : index
    %26 = vector.load %arg18[%c0_21, %c128] : memref<128x384xf32, #tpu.memory_space<vmem>>, vector<128x128xf32>
    tpu.vector_store %arg18[%c0_21, %c128], %25 {strides = array<i32>} : memref<128x384xf32, #tpu.memory_space<vmem>>, vector<128x128xf32>,
    %c0_22 = arith.constant 0 : index
    %c0_23 = arith.constant 0 : index
    %27 = vector.load %arg8[%c0_22, %c0_23] : memref<128x128xf32, #tpu.memory_space<vmem>>, vector<128x128xf32>
    %cst_24 = arith.constant dense<0.000000e+00> : vector<128x128xf32>
    %28 = tpu.matmul %25, %27, %cst_24 {dimension_numbers = #tpu.dot_dimension_numbers<[1], [0], [0], [1], [0, 0, 1, 1], [], []>} : vector<128x128xf32>, vector<128x128xf32>, vector<128x128xf32> -> vector<128x128xf32>
    %c0_25 = arith.constant 0 : index
    %c0_26 = arith.constant 0 : index
    %29 = vector.load %arg9[%c0_25, %c0_26] : memref<1x128xf32, #tpu.memory_space<vmem>>, vector<1x128xf32>
    %30 = vector.broadcast %29 : vector<1x128xf32> to vector<128x128xf32>
    %31 = arith.addf %28, %30 : vector<128x128xf32>
    %32 = vector.extract_strided_slice %31 {offsets = [0, 0], sizes = [128, 16], strides = [1, 1]} : vector<128x128xf32> to vector<128x16xf32>
    %c0_27 = arith.constant 0 : index
    %c256 = arith.constant 256 : index
    %33 = vector.load %arg18[%c0_27, %c256] : memref<128x384xf32, #tpu.memory_space<vmem>>, vector<128x16xf32>
    tpu.vector_store %arg18[%c0_27, %c256], %32 {strides = array<i32>} : memref<128x384xf32, #tpu.memory_space<vmem>>, vector<128x16xf32>,
    %c0_28 = arith.constant 0 : index
    %c0_29 = arith.constant 0 : index
    %34 = vector.load %arg10[%c0_28, %c0_29] : memref<128x128xf32, #tpu.memory_space<vmem>>, vector<128x128xf32>
    %cst_30 = arith.constant dense<0.000000e+00> : vector<128x128xf32>
    %35 = tpu.matmul %31, %34, %cst_30 {dimension_numbers = #tpu.dot_dimension_numbers<[1], [0], [0], [1], [0, 0, 1, 1], [], []>} : vector<128x128xf32>, vector<128x128xf32>, vector<128x128xf32> -> vector<128x128xf32>
    %c0_31 = arith.constant 0 : index
    %c0_32 = arith.constant 0 : index
    %36 = vector.load %arg11[%c0_31, %c0_32] : memref<1x128xf32, #tpu.memory_space<vmem>>, vector<1x128xf32>
    %37 = vector.broadcast %36 : vector<1x128xf32> to vector<128x128xf32>
    %38 = arith.addf %35, %37 : vector<128x128xf32>
    %cst_33 = arith.constant 0.000000e+00 : f32
    %39 = vector.broadcast %cst_33 : f32 to vector<128x128xf32>
    %40 = arith.maximumf %38, %39 : vector<128x128xf32>
    %c0_34 = arith.constant 0 : index
    %c0_35 = arith.constant 0 : index
    %41 = vector.load %arg12[%c0_34, %c0_35] : memref<128x128xf32, #tpu.memory_space<vmem>>, vector<128x128xf32>
    %cst_36 = arith.constant dense<0.000000e+00> : vector<128x128xf32>
    %42 = tpu.matmul %40, %41, %cst_36 {dimension_numbers = #tpu.dot_dimension_numbers<[1], [0], [0], [1], [0, 0, 1, 1], [], []>} : vector<128x128xf32>, vector<128x128xf32>, vector<128x128xf32> -> vector<128x128xf32>
    %c0_37 = arith.constant 0 : index
    %c0_38 = arith.constant 0 : index
    %43 = vector.load %arg13[%c0_37, %c0_38] : memref<1x128xf32, #tpu.memory_space<vmem>>, vector<1x128xf32>
    %44 = vector.broadcast %43 : vector<1x128xf32> to vector<128x128xf32>
    %45 = arith.addf %42, %44 : vector<128x128xf32>
    %cst_39 = arith.constant 0.000000e+00 : f32
    %46 = vector.broadcast %cst_39 : f32 to vector<128x128xf32>
    %47 = arith.maximumf %45, %46 : vector<128x128xf32>
    %c0_40 = arith.constant 0 : index
    %c0_41 = arith.constant 0 : index
    %48 = vector.load %arg14[%c0_40, %c0_41] : memref<128x128xf32, #tpu.memory_space<vmem>>, vector<128x128xf32>
    %cst_42 = arith.constant dense<0.000000e+00> : vector<128x128xf32>
    %49 = tpu.matmul %47, %48, %cst_42 {dimension_numbers = #tpu.dot_dimension_numbers<[1], [0], [0], [1], [0, 0, 1, 1], [], []>} : vector<128x128xf32>, vector<128x128xf32>, vector<128x128xf32> -> vector<128x128xf32>
    %c0_43 = arith.constant 0 : index
    %c0_44 = arith.constant 0 : index
    %50 = vector.load %arg15[%c0_43, %c0_44] : memref<1x128xf32, #tpu.memory_space<vmem>>, vector<1x128xf32>
    %51 = vector.broadcast %50 : vector<1x128xf32> to vector<128x128xf32>
    %52 = arith.addf %49, %51 : vector<128x128xf32>
    %cst_45 = arith.constant 0.000000e+00 : f32
    %53 = vector.broadcast %cst_45 : f32 to vector<128x128xf32>
    %54 = arith.maximumf %52, %53 : vector<128x128xf32>
    %c0_46 = arith.constant 0 : index
    %c0_47 = arith.constant 0 : index
    %55 = vector.load %arg16[%c0_46, %c0_47] : memref<128x128xf32, #tpu.memory_space<vmem>>, vector<128x128xf32>
    %cst_48 = arith.constant dense<0.000000e+00> : vector<128x128xf32>
    %56 = tpu.matmul %54, %55, %cst_48 {dimension_numbers = #tpu.dot_dimension_numbers<[1], [0], [0], [1], [0, 0, 1, 1], [], []>} : vector<128x128xf32>, vector<128x128xf32>, vector<128x128xf32> -> vector<128x128xf32>
    %c0_49 = arith.constant 0 : index
    %c0_50 = arith.constant 0 : index
    %57 = vector.load %arg17[%c0_49, %c0_50] : memref<1x128xf32, #tpu.memory_space<vmem>>, vector<1x128xf32>
    %58 = vector.broadcast %57 : vector<1x128xf32> to vector<128x128xf32>
    %59 = arith.addf %56, %58 : vector<128x128xf32>
    %60 = vector.extract_strided_slice %59 {offsets = [0, 0], sizes = [128, 32], strides = [1, 1]} : vector<128x128xf32> to vector<128x32xf32>
    %c0_51 = arith.constant 0 : index
    %c272 = arith.constant 272 : index
    %61 = vector.load %arg18[%c0_51, %c272] : memref<128x384xf32, #tpu.memory_space<vmem>>, vector<128x32xf32>
    tpu.vector_store %arg18[%c0_51, %c272], %60 {strides = array<i32>} : memref<128x384xf32, #tpu.memory_space<vmem>>, vector<128x32xf32>,
    return
  }
  func.func @transform_0(%arg0: i32) -> (i32, i32) {
    %c0_i32 = arith.constant 0 : i32
    %c0_i32_0 = arith.constant 0 : i32
    return %arg0, %c0_i32 : i32, i32
  }
  func.func @transform_1(%arg0: i32) -> (i32, i32) {
    %c0_i32 = arith.constant 0 : i32
    %c0_i32_0 = arith.constant 0 : i32
    %c0_i32_1 = arith.constant 0 : i32
    return %c0_i32, %c0_i32_0 : i32, i32
  }
  func.func @transform_2(%arg0: i32) -> (i32, i32) {
    %c0_i32 = arith.constant 0 : i32
    %c0_i32_0 = arith.constant 0 : i32
    %c0_i32_1 = arith.constant 0 : i32
    return %c0_i32, %c0_i32_0 : i32, i32
  }
  func.func @transform_3(%arg0: i32) -> (i32, i32) {
    %c0_i32 = arith.constant 0 : i32
    %c0_i32_0 = arith.constant 0 : i32
    %c0_i32_1 = arith.constant 0 : i32
    return %c0_i32, %c0_i32_0 : i32, i32
  }
  func.func @transform_4(%arg0: i32) -> (i32, i32) {
    %c0_i32 = arith.constant 0 : i32
    %c0_i32_0 = arith.constant 0 : i32
    %c0_i32_1 = arith.constant 0 : i32
    return %c0_i32, %c0_i32_0 : i32, i32
  }
  func.func @transform_5(%arg0: i32) -> (i32, i32) {
    %c0_i32 = arith.constant 0 : i32
    %c0_i32_0 = arith.constant 0 : i32
    %c0_i32_1 = arith.constant 0 : i32
    return %c0_i32, %c0_i32_0 : i32, i32
  }
  func.func @transform_6(%arg0: i32) -> (i32, i32) {
    %c0_i32 = arith.constant 0 : i32
    %c0_i32_0 = arith.constant 0 : i32
    %c0_i32_1 = arith.constant 0 : i32
    return %c0_i32, %c0_i32_0 : i32, i32
  }
  func.func @transform_7(%arg0: i32) -> (i32, i32) {
    %c0_i32 = arith.constant 0 : i32
    %c0_i32_0 = arith.constant 0 : i32
    %c0_i32_1 = arith.constant 0 : i32
    return %c0_i32, %c0_i32_0 : i32, i32
  }
  func.func @transform_8(%arg0: i32) -> (i32, i32) {
    %c0_i32 = arith.constant 0 : i32
    %c0_i32_0 = arith.constant 0 : i32
    %c0_i32_1 = arith.constant 0 : i32
    return %c0_i32, %c0_i32_0 : i32, i32
  }
  func.func @transform_9(%arg0: i32) -> (i32, i32) {
    %c0_i32 = arith.constant 0 : i32
    %c0_i32_0 = arith.constant 0 : i32
    %c0_i32_1 = arith.constant 0 : i32
    return %c0_i32, %c0_i32_0 : i32, i32
  }
  func.func @transform_10(%arg0: i32) -> (i32, i32) {
    %c0_i32 = arith.constant 0 : i32
    %c0_i32_0 = arith.constant 0 : i32
    %c0_i32_1 = arith.constant 0 : i32
    return %c0_i32, %c0_i32_0 : i32, i32
  }
  func.func @transform_11(%arg0: i32) -> (i32, i32) {
    %c0_i32 = arith.constant 0 : i32
    %c0_i32_0 = arith.constant 0 : i32
    %c0_i32_1 = arith.constant 0 : i32
    return %c0_i32, %c0_i32_0 : i32, i32
  }
  func.func @transform_12(%arg0: i32) -> (i32, i32) {
    %c0_i32 = arith.constant 0 : i32
    %c0_i32_0 = arith.constant 0 : i32
    %c0_i32_1 = arith.constant 0 : i32
    return %c0_i32, %c0_i32_0 : i32, i32
  }
  func.func @transform_13(%arg0: i32) -> (i32, i32) {
    %c0_i32 = arith.constant 0 : i32
    %c0_i32_0 = arith.constant 0 : i32
    %c0_i32_1 = arith.constant 0 : i32
    return %c0_i32, %c0_i32_0 : i32, i32
  }
  func.func @transform_14(%arg0: i32) -> (i32, i32) {
    %c0_i32 = arith.constant 0 : i32
    %c0_i32_0 = arith.constant 0 : i32
    %c0_i32_1 = arith.constant 0 : i32
    return %c0_i32, %c0_i32_0 : i32, i32
  }
  func.func @transform_15(%arg0: i32) -> (i32, i32) {
    %c0_i32 = arith.constant 0 : i32
    %c0_i32_0 = arith.constant 0 : i32
    %c0_i32_1 = arith.constant 0 : i32
    return %c0_i32, %c0_i32_0 : i32, i32
  }
  func.func @transform_16(%arg0: i32) -> (i32, i32) {
    %c0_i32 = arith.constant 0 : i32
    %c0_i32_0 = arith.constant 0 : i32
    %c0_i32_1 = arith.constant 0 : i32
    return %c0_i32, %c0_i32_0 : i32, i32
  }
  func.func @transform_17(%arg0: i32) -> (i32, i32) {
    %c0_i32 = arith.constant 0 : i32
    %c0_i32_0 = arith.constant 0 : i32
    return %arg0, %c0_i32 : i32, i32
  }
}

</mosaic_0001>

<llo_original>
// kernel: tpu_custom_call.1
$region0: #{tpu_custom_call.1}
  #allocation0 [shape = 'u32[]', space=smem, size = 0x4, offset = 0x4, fixed_abs, tag = 'smem constant byte address 0x4 - core index']
  #allocation1 [shape = 'u32[144,128]{1,0:T(1,128)}', space=vmem, size = 0x12000, scoped, tag = 'internal scratch']
  %s0 = inlined_call_operand.hbm [shape: f32[256,128], index: 0, kind: input, shape index: {}]
  %s1 = inlined_call_operand.hbm [shape: f32[128,128], index: 1, kind: input, shape index: {}]
  %s2 = inlined_call_operand.vmem [shape: f32[1,128], index: 2, kind: input, shape index: {}]
  %s3 = inlined_call_operand.hbm [shape: f32[128,128], index: 3, kind: input, shape index: {}]
  %s4 = inlined_call_operand.vmem [shape: f32[1,128], index: 4, kind: input, shape index: {}]
  %s5 = inlined_call_operand.hbm [shape: f32[128,128], index: 5, kind: input, shape index: {}]
  %s6 = inlined_call_operand.vmem [shape: f32[1,128], index: 6, kind: input, shape index: {}]
  %s7 = inlined_call_operand.hbm [shape: f32[128,128], index: 7, kind: input, shape index: {}]
  %s8 = inlined_call_operand.vmem [shape: f32[1,128], index: 8, kind: input, shape index: {}]
  %s9 = inlined_call_operand.hbm [shape: f32[128,128], index: 9, kind: input, shape index: {}]
  %s10 = inlined_call_operand.vmem [shape: f32[1,128], index: 10, kind: input, shape index: {}]
  %s11 = inlined_call_operand.hbm [shape: f32[128,128], index: 11, kind: input, shape index: {}]
  %s12 = inlined_call_operand.vmem [shape: f32[1,128], index: 12, kind: input, shape index: {}]
  %s13 = inlined_call_operand.hbm [shape: f32[128,128], index: 13, kind: input, shape index: {}]
  %s14 = inlined_call_operand.vmem [shape: f32[1,128], index: 14, kind: input, shape index: {}]
  %s15 = inlined_call_operand.hbm [shape: f32[128,128], index: 15, kind: input, shape index: {}]
  %s16 = inlined_call_operand.vmem [shape: f32[1,128], index: 16, kind: input, shape index: {}]
  %s17 = inlined_call_operand.hbm [shape: f32[256,384], index: 17, kind: output, shape index: {}]
  %s18 = sld [smem:[#allocation0]]
  $region137: #{tpu_custom_call.1} parent=0
    _
  %s20 = ssub.s32 1, %s18
  %s21 = scalar_select 0, %s20, %s18
  $region1: #{tpu_custom_call.1} parent=0
    #allocation2 [shape = 'u8[131072]{0}', space=vmem, size = 0x20000, scoped, tag = 'input window, operand 0']
    #allocation3 [shape = 's32[2]{0}', space=sflag, size = 0x8, scoped, tag = 'scoped memory for tpu_custom_call.1']
    #allocation4 [shape = 's32[2]{0}', space=sflag, size = 0x8, scoped, tag = 'scoped memory for tpu_custom_call.1']
    #allocation5 [shape = 'u8[65536]{0}', space=vmem, size = 0x10000, scoped, tag = 'input window, operand 1, single buffered']
    #allocation6 [shape = 's32[1]{0}', space=sflag, size = 0x4, scoped, tag = 'scoped memory for tpu_custom_call.1']
    #allocation7 [shape = 'u8[65536]{0}', space=vmem, size = 0x10000, scoped, tag = 'input window, operand 3, single buffered']
    #allocation8 [shape = 'u8[65536]{0}', space=vmem, size = 0x10000, scoped, tag = 'input window, operand 5, single buffered']
    #allocation9 [shape = 's32[1]{0}', space=sflag, size = 0x4, scoped, tag = 'scoped memory for tpu_custom_call.1']
    #allocation10 [shape = 'u8[65536]{0}', space=vmem, size = 0x10000, scoped, tag = 'input window, operand 7, single buffered']
    #allocation11 [shape = 'u8[65536]{0}', space=vmem, size = 0x10000, scoped, tag = 'input window, operand 9, single buffered']
    #allocation12 [shape = 's32[1]{0}', space=sflag, size = 0x4, scoped, tag = 'scoped memory for tpu_custom_call.1']
    #allocation13 [shape = 'u8[65536]{0}', space=vmem, size = 0x10000, scoped, tag = 'input window, operand 11, single buffered']
    #allocation14 [shape = 'u8[65536]{0}', space=vmem, size = 0x10000, scoped, tag = 'input window, operand 13, single buffered']
    #allocation15 [shape = 's32[1]{0}', space=sflag, size = 0x4, scoped, tag = 'scoped memory for tpu_custom_call.1']
    #allocation16 [shape = 'u8[65536]{0}', space=vmem, size = 0x10000, scoped, tag = 'input window, operand 15, single buffered']
    #allocation17 [shape = 'u8[393216]{0}', space=vmem, size = 0x60000, scoped, tag = 'output window, operand 0']
    %22 = vsyncpa [#allocation3], 0
    %s23 = scalar_lea.sflag [#allocation3], 1
    %24 = vsyncpa %s23, 0
    %25 = vsyncpa [#allocation6], 0
    %26 = vsyncpa [#allocation9], 0
    %27 = vsyncpa [#allocation12], 0
    %28 = vsyncpa [#allocation15], 0
    %29 = vsyncpa [#allocation4], 0
    %s30 = scalar_lea.sflag [#allocation4], 1
    %31 = vsyncpa %s30, 0
    loop: start=0, step=1, limit=4
    $region2: #{tpu_custom_call.1} parent=1 // loop_pre_header
      _
    $region3: #{tpu_custom_call.1} parent=1 // loop_header
      %s33 = sphi 0, %s37
      %p34 = scmp.ge.s32.totalorder %s33, 4
      %s43 = sphi 0, %s45
      %s46 = sphi 0, %s43
      %s47 = sphi 0, %s46
      %s63 = sphi 0, %s47
      %s67 = sphi 0, %s67
      %s69 = sphi 0, %s67
      %s70 = sphi 0, %s69
      %s84 = sphi 0, %s70
      %s88 = sphi 0, %s88
      %s90 = sphi 0, %s88
      %s91 = sphi 0, %s90
      %s105 = sphi 0, %s91
      %s109 = sphi 0, %s109
      %s111 = sphi 0, %s109
      %s112 = sphi 0, %s111
      %s126 = sphi 0, %s112
      %s130 = sphi 0, %s130
      %s132 = sphi 0, %s130
      %s133 = sphi 0, %s132
      %s147 = sphi 0, %s133
      %s151 = sphi 0, %s151
      %s153 = sphi 0, %s151
      %s154 = sphi 0, %s153
      %s168 = sphi 0, %s154
      %s172 = sphi 0, %s172
      %s174 = sphi 0, %s172
      %s175 = sphi 0, %s174
      %s189 = sphi 0, %s175
      %s193 = sphi 0, %s193
      %s195 = sphi 0, %s193
      %s196 = sphi 0, %s195
      %s210 = sphi 0, %s196
      %s214 = sphi 0, %s214
      %s216 = sphi 0, %s214
      %s217 = sphi 0, %s216
      %s231 = sphi 0, %s217
      %s235 = sphi 0, %s235
      %s237 = sphi 0, %s235
      %s238 = sphi 0, %s237
      %s252 = sphi 0, %s238
      %s256 = sphi 0, %s256
      %s258 = sphi 0, %s256
      %s259 = sphi 0, %s258
      %s273 = sphi 0, %s259
      %s277 = sphi 0, %s277
      %s279 = sphi 0, %s277
      %s280 = sphi 0, %s279
      %s294 = sphi 0, %s280
      %s298 = sphi 0, %s298
      %s300 = sphi 0, %s298
      %s301 = sphi 0, %s300
      %s315 = sphi 0, %s301
      %s319 = sphi 0, %s319
      %s321 = sphi 0, %s319
      %s322 = sphi 0, %s321
      %s336 = sphi 0, %s322
      %s340 = sphi 0, %s340
      %s342 = sphi 0, %s340
      %s343 = sphi 0, %s342
      %s357 = sphi 0, %s343
      %s361 = sphi 0, %s361
      %s363 = sphi 0, %s361
      %s364 = sphi 0, %s363
      %s378 = sphi 0, %s364
      %s382 = sphi 0, %s382
      %s384 = sphi 0, %s382
      %s385 = sphi 0, %s384
      %s399 = sphi 0, %s385
      %s405 = sphi 0, %s407
      %s408 = sphi 0, %s405
      %s409 = sphi 0, %s408
      %s425 = sphi 0, %s409
    $region4: #{tpu_custom_call.1} parent=1 // loop_header_branch
      %36 = sbr.rel (%p34) target = $region8
    $region5: #{tpu_custom_call.1} parent=1 // loop_body
      %s38 = ssub.s32 %s33, 1
      %s39 = ssub.s32 %s33, 2
      %s40 = sadd.s32 %s33, 1
      %s41 = ssub.s32 %s33, %s40
      %p42 = scmp.eq.s32.totalorder %s41, 0
      %s44 = sadd.s32 %s43, 1
      %s45 = scalar_select %p42, %s43, %s44
      %p48 = pneg %p42
      %p49 = scmp.eq.s32.totalorder %s33, 1
      %p50 = por %p48, %p49
      %p51 = scmp.ne.s32.totalorder %s43, %s46
      %p52 = scmp.eq.s32.totalorder %s33, 0
      %p53 = por %p51, %p52
      %p54 = scmp.ne.s32.totalorder %s43, %s46
      %p55 = scmp.eq.s32.totalorder %s38, 1
      %p56 = por %p54, %p55
      %p57 = scmp.ne.s32.totalorder %s46, %s47
      %p58 = scmp.eq.s32.totalorder %s38, 0
      %p59 = por %p57, %p58
      %p60 = scmp.ne.s32.totalorder %s46, %s47
      %p61 = scmp.eq.s32.totalorder %s39, 1
      %p62 = por %p60, %p61
      %p64 = scmp.ne.s32.totalorder %s47, %s63
      %p65 = scmp.eq.s32.totalorder %s39, 0
      %p66 = por %p64, %p65
      %s68 = sadd.s32 %s67, 1
      %p71 = scmp.eq.s32.totalorder %s33, 1
      %p72 = scmp.ne.s32.totalorder %s67, %s69
      %p73 = scmp.eq.s32.totalorder %s33, 0
      %p74 = por %p72, %p73
      %p75 = scmp.ne.s32.totalorder %s67, %s69
      %p76 = scmp.eq.s32.totalorder %s38, 1
      %p77 = por %p75, %p76
      %p78 = scmp.ne.s32.totalorder %s69, %s70
      %p79 = scmp.eq.s32.totalorder %s38, 0
      %p80 = por %p78, %p79
      %p81 = scmp.ne.s32.totalorder %s69, %s70
      %p82 = scmp.eq.s32.totalorder %s39, 1
      %p83 = por %p81, %p82
      %p85 = scmp.ne.s32.totalorder %s70, %s84
      %p86 = scmp.eq.s32.totalorder %s39, 0
      %p87 = por %p85, %p86
      %s89 = sadd.s32 %s88, 1
      %p92 = scmp.eq.s32.totalorder %s33, 1
      %p93 = scmp.ne.s32.totalorder %s88, %s90
      %p94 = scmp.eq.s32.totalorder %s33, 0
      %p95 = por %p93, %p94
      %p96 = scmp.ne.s32.totalorder %s88, %s90
      %p97 = scmp.eq.s32.totalorder %s38, 1
      %p98 = por %p96, %p97
      %p99 = scmp.ne.s32.totalorder %s90, %s91
      %p100 = scmp.eq.s32.totalorder %s38, 0
      %p101 = por %p99, %p100
      %p102 = scmp.ne.s32.totalorder %s90, %s91
      %p103 = scmp.eq.s32.totalorder %s39, 1
      %p104 = por %p102, %p103
      %p106 = scmp.ne.s32.totalorder %s91, %s105
      %p107 = scmp.eq.s32.totalorder %s39, 0
      %p108 = por %p106, %p107
      %s110 = sadd.s32 %s109, 1
      %p113 = scmp.eq.s32.totalorder %s33, 1
      %p114 = scmp.ne.s32.totalorder %s109, %s111
      %p115 = scmp.eq.s32.totalorder %s33, 0
      %p116 = por %p114, %p115
      %p117 = scmp.ne.s32.totalorder %s109, %s111
      %p118 = scmp.eq.s32.totalorder %s38, 1
      %p119 = por %p117, %p118
      %p120 = scmp.ne.s32.totalorder %s111, %s112
      %p121 = scmp.eq.s32.totalorder %s38, 0
      %p122 = por %p120, %p121
      %p123 = scmp.ne.s32.totalorder %s111, %s112
      %p124 = scmp.eq.s32.totalorder %s39, 1
      %p125 = por %p123, %p124
      %p127 = scmp.ne.s32.totalorder %s112, %s126
      %p128 = scmp.eq.s32.totalorder %s39, 0
      %p129 = por %p127, %p128
      %s131 = sadd.s32 %s130, 1
      %p134 = scmp.eq.s32.totalorder %s33, 1
      %p135 = scmp.ne.s32.totalorder %s130, %s132
      %p136 = scmp.eq.s32.totalorder %s33, 0
      %p137 = por %p135, %p136
      %p138 = scmp.ne.s32.totalorder %s130, %s132
      %p139 = scmp.eq.s32.totalorder %s38, 1
      %p140 = por %p138, %p139
      %p141 = scmp.ne.s32.totalorder %s132, %s133
      %p142 = scmp.eq.s32.totalorder %s38, 0
      %p143 = por %p141, %p142
      %p144 = scmp.ne.s32.totalorder %s132, %s133
      %p145 = scmp.eq.s32.totalorder %s39, 1
      %p146 = por %p144, %p145
      %p148 = scmp.ne.s32.totalorder %s133, %s147
      %p149 = scmp.eq.s32.totalorder %s39, 0
      %p150 = por %p148, %p149
      %s152 = sadd.s32 %s151, 1
      %p155 = scmp.eq.s32.totalorder %s33, 1
      %p156 = scmp.ne.s32.totalorder %s151, %s153
      %p157 = scmp.eq.s32.totalorder %s33, 0
      %p158 = por %p156, %p157
      %p159 = scmp.ne.s32.totalorder %s151, %s153
      %p160 = scmp.eq.s32.totalorder %s38, 1
      %p161 = por %p159, %p160
      %p162 = scmp.ne.s32.totalorder %s153, %s154
      %p163 = scmp.eq.s32.totalorder %s38, 0
      %p164 = por %p162, %p163
      %p165 = scmp.ne.s32.totalorder %s153, %s154
      %p166 = scmp.eq.s32.totalorder %s39, 1
      %p167 = por %p165, %p166
      %p169 = scmp.ne.s32.totalorder %s154, %s168
      %p170 = scmp.eq.s32.totalorder %s39, 0
      %p171 = por %p169, %p170
      %s173 = sadd.s32 %s172, 1
      %p176 = scmp.eq.s32.totalorder %s33, 1
      %p177 = scmp.ne.s32.totalorder %s172, %s174
      %p178 = scmp.eq.s32.totalorder %s33, 0
      %p179 = por %p177, %p178
      %p180 = scmp.ne.s32.totalorder %s172, %s174
      %p181 = scmp.eq.s32.totalorder %s38, 1
      %p182 = por %p180, %p181
      %p183 = scmp.ne.s32.totalorder %s174, %s175
      %p184 = scmp.eq.s32.totalorder %s38, 0
      %p185 = por %p183, %p184
      %p186 = scmp.ne.s32.totalorder %s174, %s175
      %p187 = scmp.eq.s32.totalorder %s39, 1
      %p188 = por %p186, %p187
      %p190 = scmp.ne.s32.totalorder %s175, %s189
      %p191 = scmp.eq.s32.totalorder %s39, 0
      %p192 = por %p190, %p191
      %s194 = sadd.s32 %s193, 1
      %p197 = scmp.eq.s32.totalorder %s33, 1
      %p198 = scmp.ne.s32.totalorder %s193, %s195
      %p199 = scmp.eq.s32.totalorder %s33, 0
      %p200 = por %p198, %p199
      %p201 = scmp.ne.s32.totalorder %s193, %s195
      %p202 = scmp.eq.s32.totalorder %s38, 1
      %p203 = por %p201, %p202
      %p204 = scmp.ne.s32.totalorder %s195, %s196
      %p205 = scmp.eq.s32.totalorder %s38, 0
      %p206 = por %p204, %p205
      %p207 = scmp.ne.s32.totalorder %s195, %s196
      %p208 = scmp.eq.s32.totalorder %s39, 1
      %p209 = por %p207, %p208
      %p211 = scmp.ne.s32.totalorder %s196, %s210
      %p212 = scmp.eq.s32.totalorder %s39, 0
      %p213 = por %p211, %p212
      %s215 = sadd.s32 %s214, 1
      %p218 = scmp.eq.s32.totalorder %s33, 1
      %p219 = scmp.ne.s32.totalorder %s214, %s216
      %p220 = scmp.eq.s32.totalorder %s33, 0
      %p221 = por %p219, %p220
      %p222 = scmp.ne.s32.totalorder %s214, %s216
      %p223 = scmp.eq.s32.totalorder %s38, 1
      %p224 = por %p222, %p223
      %p225 = scmp.ne.s32.totalorder %s216, %s217
      %p226 = scmp.eq.s32.totalorder %s38, 0
      %p227 = por %p225, %p226
      %p228 = scmp.ne.s32.totalorder %s216, %s217
      %p229 = scmp.eq.s32.totalorder %s39, 1
      %p230 = por %p228, %p229
      %p232 = scmp.ne.s32.totalorder %s217, %s231
      %p233 = scmp.eq.s32.totalorder %s39, 0
      %p234 = por %p232, %p233
      %s236 = sadd.s32 %s235, 1
      %p239 = scmp.eq.s32.totalorder %s33, 1
      %p240 = scmp.ne.s32.totalorder %s235, %s237
      %p241 = scmp.eq.s32.totalorder %s33, 0
      %p242 = por %p240, %p241
      %p243 = scmp.ne.s32.totalorder %s235, %s237
      %p244 = scmp.eq.s32.totalorder %s38, 1
      %p245 = por %p243, %p244
      %p246 = scmp.ne.s32.totalorder %s237, %s238
      %p247 = scmp.eq.s32.totalorder %s38, 0
      %p248 = por %p246, %p247
      %p249 = scmp.ne.s32.totalorder %s237, %s238
      %p250 = scmp.eq.s32.totalorder %s39, 1
      %p251 = por %p249, %p250
      %p253 = scmp.ne.s32.totalorder %s238, %s252
      %p254 = scmp.eq.s32.totalorder %s39, 0
      %p255 = por %p253, %p254
      %s257 = sadd.s32 %s256, 1
      %p260 = scmp.eq.s32.totalorder %s33, 1
      %p261 = scmp.ne.s32.totalorder %s256, %s258
      %p262 = scmp.eq.s32.totalorder %s33, 0
      %p263 = por %p261, %p262
      %p264 = scmp.ne.s32.totalorder %s256, %s258
      %p265 = scmp.eq.s32.totalorder %s38, 1
      %p266 = por %p264, %p265
      %p267 = scmp.ne.s32.totalorder %s258, %s259
      %p268 = scmp.eq.s32.totalorder %s38, 0
      %p269 = por %p267, %p268
      %p270 = scmp.ne.s32.totalorder %s258, %s259
      %p271 = scmp.eq.s32.totalorder %s39, 1
      %p272 = por %p270, %p271
      %p274 = scmp.ne.s32.totalorder %s259, %s273
      %p275 = scmp.eq.s32.totalorder %s39, 0
      %p276 = por %p274, %p275
      %s278 = sadd.s32 %s277, 1
      %p281 = scmp.eq.s32.totalorder %s33, 1
      %p282 = scmp.ne.s32.totalorder %s277, %s279
      %p283 = scmp.eq.s32.totalorder %s33, 0
      %p284 = por %p282, %p283
      %p285 = scmp.ne.s32.totalorder %s277, %s279
      %p286 = scmp.eq.s32.totalorder %s38, 1
      %p287 = por %p285, %p286
      %p288 = scmp.ne.s32.totalorder %s279, %s280
      %p289 = scmp.eq.s32.totalorder %s38, 0
      %p290 = por %p288, %p289
      %p291 = scmp.ne.s32.totalorder %s279, %s280
      %p292 = scmp.eq.s32.totalorder %s39, 1
      %p293 = por %p291, %p292
      %p295 = scmp.ne.s32.totalorder %s280, %s294
      %p296 = scmp.eq.s32.totalorder %s39, 0
      %p297 = por %p295, %p296
      %s299 = sadd.s32 %s298, 1
      %p302 = scmp.eq.s32.totalorder %s33, 1
      %p303 = scmp.ne.s32.totalorder %s298, %s300
      %p304 = scmp.eq.s32.totalorder %s33, 0
      %p305 = por %p303, %p304
      %p306 = scmp.ne.s32.totalorder %s298, %s300
      %p307 = scmp.eq.s32.totalorder %s38, 1
      %p308 = por %p306, %p307
      %p309 = scmp.ne.s32.totalorder %s300, %s301
      %p310 = scmp.eq.s32.totalorder %s38, 0
      %p311 = por %p309, %p310
      %p312 = scmp.ne.s32.totalorder %s300, %s301
      %p313 = scmp.eq.s32.totalorder %s39, 1
      %p314 = por %p312, %p313
      %p316 = scmp.ne.s32.totalorder %s301, %s315
      %p317 = scmp.eq.s32.totalorder %s39, 0
      %p318 = por %p316, %p317
      %s320 = sadd.s32 %s319, 1
      %p323 = scmp.eq.s32.totalorder %s33, 1
      %p324 = scmp.ne.s32.totalorder %s319, %s321
      %p325 = scmp.eq.s32.totalorder %s33, 0
      %p326 = por %p324, %p325
      %p327 = scmp.ne.s32.totalorder %s319, %s321
      %p328 = scmp.eq.s32.totalorder %s38, 1
      %p329 = por %p327, %p328
      %p330 = scmp.ne.s32.totalorder %s321, %s322
      %p331 = scmp.eq.s32.totalorder %s38, 0
      %p332 = por %p330, %p331
      %p333 = scmp.ne.s32.totalorder %s321, %s322
      %p334 = scmp.eq.s32.totalorder %s39, 1
      %p335 = por %p333, %p334
      %p337 = scmp.ne.s32.totalorder %s322, %s336
      %p338 = scmp.eq.s32.totalorder %s39, 0
      %p339 = por %p337, %p338
      %s341 = sadd.s32 %s340, 1
      %p344 = scmp.eq.s32.totalorder %s33, 1
      %p345 = scmp.ne.s32.totalorder %s340, %s342
      %p346 = scmp.eq.s32.totalorder %s33, 0
      %p347 = por %p345, %p346
      %p348 = scmp.ne.s32.totalorder %s340, %s342
      %p349 = scmp.eq.s32.totalorder %s38, 1
      %p350 = por %p348, %p349
      %p351 = scmp.ne.s32.totalorder %s342, %s343
      %p352 = scmp.eq.s32.totalorder %s38, 0
      %p353 = por %p351, %p352
      %p354 = scmp.ne.s32.totalorder %s342, %s343
      %p355 = scmp.eq.s32.totalorder %s39, 1
      %p356 = por %p354, %p355
      %p358 = scmp.ne.s32.totalorder %s343, %s357
      %p359 = scmp.eq.s32.totalorder %s39, 0
      %p360 = por %p358, %p359
      %s362 = sadd.s32 %s361, 1
      %p365 = scmp.eq.s32.totalorder %s33, 1
      %p366 = scmp.ne.s32.totalorder %s361, %s363
      %p367 = scmp.eq.s32.totalorder %s33, 0
      %p368 = por %p366, %p367
      %p369 = scmp.ne.s32.totalorder %s361, %s363
      %p370 = scmp.eq.s32.totalorder %s38, 1
      %p371 = por %p369, %p370
      %p372 = scmp.ne.s32.totalorder %s363, %s364
      %p373 = scmp.eq.s32.totalorder %s38, 0
      %p374 = por %p372, %p373
      %p375 = scmp.ne.s32.totalorder %s363, %s364
      %p376 = scmp.eq.s32.totalorder %s39, 1
      %p377 = por %p375, %p376
      %p379 = scmp.ne.s32.totalorder %s364, %s378
      %p380 = scmp.eq.s32.totalorder %s39, 0
      %p381 = por %p379, %p380
      %s383 = sadd.s32 %s382, 1
      %p386 = scmp.eq.s32.totalorder %s33, 1
      %p387 = scmp.ne.s32.totalorder %s382, %s384
      %p388 = scmp.eq.s32.totalorder %s33, 0
      %p389 = por %p387, %p388
      %p390 = scmp.ne.s32.totalorder %s382, %s384
      %p391 = scmp.eq.s32.totalorder %s38, 1
      %p392 = por %p390, %p391
      %p393 = scmp.ne.s32.totalorder %s384, %s385
      %p394 = scmp.eq.s32.totalorder %s38, 0
      %p395 = por %p393, %p394
      %p396 = scmp.ne.s32.totalorder %s384, %s385
      %p397 = scmp.eq.s32.totalorder %s39, 1
      %p398 = por %p396, %p397
      %p400 = scmp.ne.s32.totalorder %s385, %s399
      %p401 = scmp.eq.s32.totalorder %s39, 0
      %p402 = por %p400, %p401
      %s403 = ssub.s32 %s33, %s40
      %p404 = scmp.eq.s32.totalorder %s403, 0
      %s406 = sadd.s32 %s405, 1
      %s407 = scalar_select %p404, %s405, %s406
      %p410 = pneg %p404
      %p411 = scmp.eq.s32.totalorder %s33, 1
      %p412 = por %p410, %p411
      %p413 = scmp.ne.s32.totalorder %s405, %s408
      %p414 = scmp.eq.s32.totalorder %s33, 0
      %p415 = por %p413, %p414
      %p416 = scmp.ne.s32.totalorder %s405, %s408
      %p417 = scmp.eq.s32.totalorder %s38, 1
      %p418 = por %p416, %p417
      %p419 = scmp.ne.s32.totalorder %s408, %s409
      %p420 = scmp.eq.s32.totalorder %s38, 0
      %p421 = por %p419, %p420
      %p422 = scmp.ne.s32.totalorder %s408, %s409
      %p423 = scmp.eq.s32.totalorder %s39, 1
      %p424 = por %p422, %p423
      %p426 = scmp.ne.s32.totalorder %s409, %s425
      %p427 = scmp.eq.s32.totalorder %s39, 0
      %p428 = por %p426, %p427
      %p429 = scmp.le.s32.totalorder 1, %s33
      %p430 = scmp.lt.s32.totalorder %s33, 3
      %p431 = pnand %p429, %p430
      %p432 = pneg %p431
      // Predicated region
      $region9: #{tpu_custom_call.1} parent=5 // pred_check
        _
      $region10: #{tpu_custom_call.1} parent=5 // pred_check_branch
        %434 = sbr.rel (%p431) target = $region12
      $region11: #{tpu_custom_call.1} parent=5 // pred_region
        %s435 = ssub.s32 %s33, 1
        // Predicated region
        $region13: #{tpu_custom_call.1} parent=11 // pred_check
          %p436 = pneg %p80
        $region14: #{tpu_custom_call.1} parent=11 // pred_check_branch
          %438 = sbr.rel (%p436) target = $region16
        $region15: #{tpu_custom_call.1} parent=11 // pred_region
          %s440 = ssub.s32 2048, 2048
          %441 = vsyncadd [#allocation6], %s440
          %s442 = sshll.u32 [#allocation5], 4
          %s443 = int_to_ptr.vmem [resolvable:$true] %s442
          %448 = dma.hbm_to_vmem [thread:$0]  %s1, 2048, %s443, [#allocation6], 128, 128, 8
        $region16: #{tpu_custom_call.1} parent=11 // pred_fallthru
          _
        // Predicated region
        $region17: #{tpu_custom_call.1} parent=11 // pred_check
          %p449 = pneg %p101
        $region18: #{tpu_custom_call.1} parent=11 // pred_check_branch
          %451 = sbr.rel (%p449) target = $region20
        $region19: #{tpu_custom_call.1} parent=11 // pred_region
          _
        $region20: #{tpu_custom_call.1} parent=11 // pred_fallthru
          _
        // Predicated region
        $region21: #{tpu_custom_call.1} parent=11 // pred_check
          %p452 = pneg %p122
        $region22: #{tpu_custom_call.1} parent=11 // pred_check_branch
          %454 = sbr.rel (%p452) target = $region24
        $region23: #{tpu_custom_call.1} parent=11 // pred_region
          %s456 = ssub.s32 2048, 2048
          %457 = vsyncadd [#allocation6], %s456
          %s458 = sshll.u32 [#allocation7], 4
          %s459 = int_to_ptr.vmem [resolvable:$true] %s458
          %464 = dma.hbm_to_vmem [thread:$0]  %s3, 2048, %s459, [#allocation6], 128, 128, 8
        $region24: #{tpu_custom_call.1} parent=11 // pred_fallthru
          _
        // Predicated region
        $region25: #{tpu_custom_call.1} parent=11 // pred_check
          %p465 = pneg %p143
        $region26: #{tpu_custom_call.1} parent=11 // pred_check_branch
          %467 = sbr.rel (%p465) target = $region28
        $region27: #{tpu_custom_call.1} parent=11 // pred_region
          _
        $region28: #{tpu_custom_call.1} parent=11 // pred_fallthru
          _
        // Predicated region
        $region29: #{tpu_custom_call.1} parent=11 // pred_check
          %p468 = pneg %p164
        $region30: #{tpu_custom_call.1} parent=11 // pred_check_branch
          %470 = sbr.rel (%p468) target = $region32
        $region31: #{tpu_custom_call.1} parent=11 // pred_region
          %s472 = ssub.s32 2048, 2048
          %473 = vsyncadd [#allocation9], %s472
          %s474 = sshll.u32 [#allocation8], 4
          %s475 = int_to_ptr.vmem [resolvable:$true] %s474
          %480 = dma.hbm_to_vmem [thread:$0]  %s5, 2048, %s475, [#allocation9], 128, 128, 8
        $region32: #{tpu_custom_call.1} parent=11 // pred_fallthru
          _
        // Predicated region
        $region33: #{tpu_custom_call.1} parent=11 // pred_check
          %p481 = pneg %p185
        $region34: #{tpu_custom_call.1} parent=11 // pred_check_branch
          %483 = sbr.rel (%p481) target = $region36
        $region35: #{tpu_custom_call.1} parent=11 // pred_region
          _
        $region36: #{tpu_custom_call.1} parent=11 // pred_fallthru
          _
        // Predicated region
        $region37: #{tpu_custom_call.1} parent=11 // pred_check
          %p484 = pneg %p206
        $region38: #{tpu_custom_call.1} parent=11 // pred_check_branch
          %486 = sbr.rel (%p484) target = $region40
        $region39: #{tpu_custom_call.1} parent=11 // pred_region
          %s488 = ssub.s32 2048, 2048
          %489 = vsyncadd [#allocation9], %s488
          %s490 = sshll.u32 [#allocation10], 4
          %s491 = int_to_ptr.vmem [resolvable:$true] %s490
          %496 = dma.hbm_to_vmem [thread:$0]  %s7, 2048, %s491, [#allocation9], 128, 128, 8
        $region40: #{tpu_custom_call.1} parent=11 // pred_fallthru
          _
        // Predicated region
        $region41: #{tpu_custom_call.1} parent=11 // pred_check
          %p497 = pneg %p227
        $region42: #{tpu_custom_call.1} parent=11 // pred_check_branch
          %499 = sbr.rel (%p497) target = $region44
        $region43: #{tpu_custom_call.1} parent=11 // pred_region
          _
        $region44: #{tpu_custom_call.1} parent=11 // pred_fallthru
          _
        // Predicated region
        $region45: #{tpu_custom_call.1} parent=11 // pred_check
          %p500 = pneg %p248
        $region46: #{tpu_custom_call.1} parent=11 // pred_check_branch
          %502 = sbr.rel (%p500) target = $region48
        $region47: #{tpu_custom_call.1} parent=11 // pred_region
          %s504 = ssub.s32 2048, 2048
          %505 = vsyncadd [#allocation12], %s504
          %s506 = sshll.u32 [#allocation11], 4
          %s507 = int_to_ptr.vmem [resolvable:$true] %s506
          %512 = dma.hbm_to_vmem [thread:$0]  %s9, 2048, %s507, [#allocation12], 128, 128, 8
        $region48: #{tpu_custom_call.1} parent=11 // pred_fallthru
          _
        // Predicated region
        $region49: #{tpu_custom_call.1} parent=11 // pred_check
          %p513 = pneg %p269
        $region50: #{tpu_custom_call.1} parent=11 // pred_check_branch
          %515 = sbr.rel (%p513) target = $region52
        $region51: #{tpu_custom_call.1} parent=11 // pred_region
          _
        $region52: #{tpu_custom_call.1} parent=11 // pred_fallthru
          _
        // Predicated region
        $region53: #{tpu_custom_call.1} parent=11 // pred_check
          %p516 = pneg %p290
        $region54: #{tpu_custom_call.1} parent=11 // pred_check_branch
          %518 = sbr.rel (%p516) target = $region56
        $region55: #{tpu_custom_call.1} parent=11 // pred_region
          %s520 = ssub.s32 2048, 2048
          %521 = vsyncadd [#allocation12], %s520
          %s522 = sshll.u32 [#allocation13], 4
          %s523 = int_to_ptr.vmem [resolvable:$true] %s522
          %528 = dma.hbm_to_vmem [thread:$0]  %s11, 2048, %s523, [#allocation12], 128, 128, 8
        $region56: #{tpu_custom_call.1} parent=11 // pred_fallthru
          _
        // Predicated region
        $region57: #{tpu_custom_call.1} parent=11 // pred_check
          %p529 = pneg %p311
        $region58: #{tpu_custom_call.1} parent=11 // pred_check_branch
          %531 = sbr.rel (%p529) target = $region60
        $region59: #{tpu_custom_call.1} parent=11 // pred_region
          _
        $region60: #{tpu_custom_call.1} parent=11 // pred_fallthru
          _
        // Predicated region
        $region61: #{tpu_custom_call.1} parent=11 // pred_check
          %p532 = pneg %p332
        $region62: #{tpu_custom_call.1} parent=11 // pred_check_branch
          %534 = sbr.rel (%p532) target = $region64
        $region63: #{tpu_custom_call.1} parent=11 // pred_region
          %s536 = ssub.s32 2048, 2048
          %537 = vsyncadd [#allocation15], %s536
          %s538 = sshll.u32 [#allocation14], 4
          %s539 = int_to_ptr.vmem [resolvable:$true] %s538
          %544 = dma.hbm_to_vmem [thread:$0]  %s13, 2048, %s539, [#allocation15], 128, 128, 8
        $region64: #{tpu_custom_call.1} parent=11 // pred_fallthru
          _
        // Predicated region
        $region65: #{tpu_custom_call.1} parent=11 // pred_check
          %p545 = pneg %p353
        $region66: #{tpu_custom_call.1} parent=11 // pred_check_branch
          %547 = sbr.rel (%p545) target = $region68
        $region67: #{tpu_custom_call.1} parent=11 // pred_region
          _
        $region68: #{tpu_custom_call.1} parent=11 // pred_fallthru
          _
        // Predicated region
        $region69: #{tpu_custom_call.1} parent=11 // pred_check
          %p548 = pneg %p374
        $region70: #{tpu_custom_call.1} parent=11 // pred_check_branch
          %550 = sbr.rel (%p548) target = $region72
        $region71: #{tpu_custom_call.1} parent=11 // pred_region
          %s552 = ssub.s32 2048, 2048
          %553 = vsyncadd [#allocation15], %s552
          %s554 = sshll.u32 [#allocation16], 4
          %s555 = int_to_ptr.vmem [resolvable:$true] %s554
          %560 = dma.hbm_to_vmem [thread:$0]  %s15, 2048, %s555, [#allocation15], 128, 128, 8
        $region72: #{tpu_custom_call.1} parent=11 // pred_fallthru
          _
        // Predicated region
        $region73: #{tpu_custom_call.1} parent=11 // pred_check
          %p561 = pneg %p395
        $region74: #{tpu_custom_call.1} parent=11 // pred_check_branch
          %563 = sbr.rel (%p561) target = $region76
        $region75: #{tpu_custom_call.1} parent=11 // pred_region
          _
        $region76: #{tpu_custom_call.1} parent=11 // pred_fallthru
          _
      $region12: #{tpu_custom_call.1} parent=5 // pred_fallthru
        _
      %p564 = scmp.lt.s32.totalorder %s33, 2
      // Predicated region
      $region77: #{tpu_custom_call.1} parent=5 // pred_check
        %p565 = pneg %p564
      $region78: #{tpu_custom_call.1} parent=5 // pred_check_branch
        %567 = sbr.rel (%p565) target = $region80
      $region79: #{tpu_custom_call.1} parent=5 // pred_region
        // Predicated region
        $region81: #{tpu_custom_call.1} parent=79 // pred_check
          %p568 = pneg %p53
        $region82: #{tpu_custom_call.1} parent=79 // pred_check_branch
          %570 = sbr.rel (%p568) target = $region84
        $region83: #{tpu_custom_call.1} parent=79 // pred_region
          %s571 = sand.u32 %s43, 1
          %s572 = scalar_lea.sflag [#allocation3], %s571
          %s573 = sand.u32 %s43, 1
          %s574 = smul.addr %s573, 128
          %s575 = scalar_lea.vmem [#allocation2], %s574
          %s576 = smul.u32 16, %s33
          %s578 = ssub.s32 2048, 2048
          %579 = vsyncadd %s572, %s578
          %s580 = smul.addr %s576, 128
          %s581 = scalar_lea.hbm %s0, %s580
          %s582 = sshll.u32 %s575, 4
          %s583 = int_to_ptr.vmem [resolvable:$true] %s582
          %588 = dma.hbm_to_vmem [thread:$0]  %s581, 2048, %s583, %s572, 128, 128, 8
        $region84: #{tpu_custom_call.1} parent=79 // pred_fallthru
          _
      $region80: #{tpu_custom_call.1} parent=5 // pred_fallthru
        _
      %p589 = scmp.le.s32.totalorder 1, %s33
      %p590 = scmp.lt.s32.totalorder %s33, 3
      %p591 = pnand %p589, %p590
      %p592 = pneg %p591
      // Predicated region
      $region85: #{tpu_custom_call.1} parent=5 // pred_check
        _
      $region86: #{tpu_custom_call.1} parent=5 // pred_check_branch
        %594 = sbr.rel (%p591) target = $region88
      $region87: #{tpu_custom_call.1} parent=5 // pred_region
        %s595 = ssub.s32 %s33, 1
        %s596 = sand.u32 %s46, 1
        %s597 = scalar_lea.sflag [#allocation3], %s596
        %s598 = sand.u32 %s46, 1
        %s599 = smul.addr %s598, 128
        %s600 = scalar_lea.vmem [#allocation2], %s599
        // Predicated region
        $region89: #{tpu_custom_call.1} parent=87 // pred_check
          %p601 = pneg %p59
        $region90: #{tpu_custom_call.1} parent=87 // pred_check_branch
          %603 = sbr.rel (%p601) target = $region92
        $region91: #{tpu_custom_call.1} parent=87 // pred_region
          %604 = dma.done %s597, 2048
        $region92: #{tpu_custom_call.1} parent=87 // pred_fallthru
          _
        // Predicated region
        $region93: #{tpu_custom_call.1} parent=87 // pred_check
          %p605 = pneg %p80
        $region94: #{tpu_custom_call.1} parent=87 // pred_check_branch
          %607 = sbr.rel (%p605) target = $region96
        $region95: #{tpu_custom_call.1} parent=87 // pred_region
          %608 = dma.done [#allocation6], 2048
        $region96: #{tpu_custom_call.1} parent=87 // pred_fallthru
          _
        // Predicated region
        $region97: #{tpu_custom_call.1} parent=87 // pred_check
          %p609 = pneg %p122
        $region98: #{tpu_custom_call.1} parent=87 // pred_check_branch
          %611 = sbr.rel (%p609) target = $region100
        $region99: #{tpu_custom_call.1} parent=87 // pred_region
          %612 = dma.done [#allocation6], 2048
        $region100: #{tpu_custom_call.1} parent=87 // pred_fallthru
          _
        // Predicated region
        $region101: #{tpu_custom_call.1} parent=87 // pred_check
          %p613 = pneg %p164
        $region102: #{tpu_custom_call.1} parent=87 // pred_check_branch
          %615 = sbr.rel (%p613) target = $region104
        $region103: #{tpu_custom_call.1} parent=87 // pred_region
          %616 = dma.done [#allocation9], 2048
        $region104: #{tpu_custom_call.1} parent=87 // pred_fallthru
          _
        // Predicated region
        $region105: #{tpu_custom_call.1} parent=87 // pred_check
          %p617 = pneg %p206
        $region106: #{tpu_custom_call.1} parent=87 // pred_check_branch
          %619 = sbr.rel (%p617) target = $region108
        $region107: #{tpu_custom_call.1} parent=87 // pred_region
          %620 = dma.done [#allocation9], 2048
        $region108: #{tpu_custom_call.1} parent=87 // pred_fallthru
          _
        // Predicated region
        $region109: #{tpu_custom_call.1} parent=87 // pred_check
          %p621 = pneg %p248
        $region110: #{tpu_custom_call.1} parent=87 // pred_check_branch
          %623 = sbr.rel (%p621) target = $region112
        $region111: #{tpu_custom_call.1} parent=87 // pred_region
          %624 = dma.done [#allocation12], 2048
        $region112: #{tpu_custom_call.1} parent=87 // pred_fallthru
          _
        // Predicated region
        $region113: #{tpu_custom_call.1} parent=87 // pred_check
          %p625 = pneg %p290
        $region114: #{tpu_custom_call.1} parent=87 // pred_check_branch
          %627 = sbr.rel (%p625) target = $region116
        $region115: #{tpu_custom_call.1} parent=87 // pred_region
          %628 = dma.done [#allocation12], 2048
        $region116: #{tpu_custom_call.1} parent=87 // pred_fallthru
          _
        // Predicated region
        $region117: #{tpu_custom_call.1} parent=87 // pred_check
          %p629 = pneg %p332
        $region118: #{tpu_custom_call.1} parent=87 // pred_check_branch
          %631 = sbr.rel (%p629) target = $region120
        $region119: #{tpu_custom_call.1} parent=87 // pred_region
          %632 = dma.done [#allocation15], 2048
        $region120: #{tpu_custom_call.1} parent=87 // pred_fallthru
          _
        // Predicated region
        $region121: #{tpu_custom_call.1} parent=87 // pred_check
          %p633 = pneg %p374
        $region122: #{tpu_custom_call.1} parent=87 // pred_check_branch
          %635 = sbr.rel (%p633) target = $region124
        $region123: #{tpu_custom_call.1} parent=87 // pred_region
          %636 = dma.done [#allocation15], 2048
        $region124: #{tpu_custom_call.1} parent=87 // pred_fallthru
          _
        %s637 = sand.u32 %s46, 1
        %s638 = scalar_lea.sflag [#allocation3], %s637
        %s639 = sand.u32 %s46, 1
        %s640 = smul.addr %s639, 128
        %s641 = scalar_lea.vmem [#allocation2], %s640
        %p642 = pneg %p59
        %p643 = pneg %p56
        %p644 = pneg %p80
        %p645 = pneg %p77
        %p646 = pneg %p101
        %p647 = pneg %p98
        %p648 = pneg %p122
        %p649 = pneg %p119
        %p650 = pneg %p143
        %p651 = pneg %p140
        %p652 = pneg %p164
        %p653 = pneg %p161
        %p654 = pneg %p185
        %p655 = pneg %p182
        %p656 = pneg %p206
        %p657 = pneg %p203
        %p658 = pneg %p227
        %p659 = pneg %p224
        %p660 = pneg %p248
        %p661 = pneg %p245
        %p662 = pneg %p269
        %p663 = pneg %p266
        %p664 = pneg %p290
        %p665 = pneg %p287
        %p666 = pneg %p311
        %p667 = pneg %p308
        %p668 = pneg %p332
        %p669 = pneg %p329
        %p670 = pneg %p353
        %p671 = pneg %p350
        %p672 = pneg %p374
        %p673 = pneg %p371
        %p674 = pneg %p395
        %p675 = pneg %p392
        %p676 = pneg %p421
        %p677 = pneg %p418
        %s678 = sand.u32 %s408, 1
        %s679 = scalar_lea.sflag [#allocation4], %s678
        %s680 = sand.u32 %s408, 1
        %s681 = smul.addr %s680, 384
        %s682 = scalar_lea.vmem [#allocation17], %s681
        %s683 = smul.u32 16, %s38
        %s684 = smul.u32 16, %s38
        %v685 = vld [vmem:[%s600] sm:$0xff]
        %v686 = vld [vmem:[%s600 + $0x8] sm:$0xff]
        %v687 = vld [vmem:[%s600 + $0x10] sm:$0xff]
        %v688 = vld [vmem:[%s600 + $0x18] sm:$0xff]
        %v689 = vld [vmem:[%s600 + $0x20] sm:$0xff]
        %v690 = vld [vmem:[%s600 + $0x28] sm:$0xff]
        %v691 = vld [vmem:[%s600 + $0x30] sm:$0xff]
        %v692 = vld [vmem:[%s600 + $0x38] sm:$0xff]
        %v693 = vld [vmem:[%s600 + $0x40] sm:$0xff]
        %v694 = vld [vmem:[%s600 + $0x48] sm:$0xff]
        %v695 = vld [vmem:[%s600 + $0x50] sm:$0xff]
        %v696 = vld [vmem:[%s600 + $0x58] sm:$0xff]
        %v697 = vld [vmem:[%s600 + $0x60] sm:$0xff]
        %v698 = vld [vmem:[%s600 + $0x68] sm:$0xff]
        %v699 = vld [vmem:[%s600 + $0x70] sm:$0xff]
        %v700 = vld [vmem:[%s600 + $0x78] sm:$0xff]
        %v701 = vld [vmem:[#allocation5] sm:$0xff]
        %v702 = vld [vmem:[#allocation5 + $0x8] sm:$0xff]
        %v703 = vld [vmem:[#allocation5 + $0x10] sm:$0xff]
        %v704 = vld [vmem:[#allocation5 + $0x18] sm:$0xff]
        %v705 = vld [vmem:[#allocation5 + $0x20] sm:$0xff]
        %v706 = vld [vmem:[#allocation5 + $0x28] sm:$0xff]
        %v707 = vld [vmem:[#allocation5 + $0x30] sm:$0xff]
        %v708 = vld [vmem:[#allocation5 + $0x38] sm:$0xff]
        %v709 = vld [vmem:[#allocation5 + $0x40] sm:$0xff]
        %v710 = vld [vmem:[#allocation5 + $0x48] sm:$0xff]
        %v711 = vld [vmem:[#allocation5 + $0x50] sm:$0xff]
        %v712 = vld [vmem:[#allocation5 + $0x58] sm:$0xff]
        %v713 = vld [vmem:[#allocation5 + $0x60] sm:$0xff]
        %v714 = vld [vmem:[#allocation5 + $0x68] sm:$0xff]
        %v715 = vld [vmem:[#allocation5 + $0x70] sm:$0xff]
        %v716 = vld [vmem:[#allocation5 + $0x78] sm:$0xff]
        %v717 = vld [vmem:[%s2] sm:$0x1]
        %v719 = vlaneseq
        %v720 = vshrl.u32 %v719, 7
        %v721 = vsub.s32 0, %v720
        %v722 = vrot.slane %v717, %v721
        %724 = vmatprep.subr.mxu0 0.0
        %725 = vmatpush1.msra.mxu0 %v716
        %726 = vmatprep.subr.mxu0 0.0
        %727 = vmatpush1.msra.mxu0 %v715
        %728 = vmatprep.subr.mxu0 0.0
        %729 = vmatpush1.msra.mxu0 %v714
        %730 = vmatprep.subr.mxu0 0.0
        %731 = vmatpush1.msra.mxu0 %v713
        %732 = vmatprep.subr.mxu0 0.0
        %733 = vmatpush1.msra.mxu0 %v712
        %734 = vmatprep.subr.mxu0 0.0
        %735 = vmatpush1.msra.mxu0 %v711
        %736 = vmatprep.subr.mxu0 0.0
        %737 = vmatpush1.msra.mxu0 %v710
        %738 = vmatprep.subr.mxu0 0.0
        %739 = vmatpush1.msra.mxu0 %v709
        %740 = vmatprep.subr.mxu0 0.0
        %741 = vmatpush1.msra.mxu0 %v708
        %742 = vmatprep.subr.mxu0 0.0
        %743 = vmatpush1.msra.mxu0 %v707
        %744 = vmatprep.subr.mxu0 0.0
        %745 = vmatpush1.msra.mxu0 %v706
        %746 = vmatprep.subr.mxu0 0.0
        %747 = vmatpush1.msra.mxu0 %v705
        %748 = vmatprep.subr.mxu0 0.0
        %749 = vmatpush1.msra.mxu0 %v704
        %750 = vmatprep.subr.mxu0 0.0
        %751 = vmatpush1.msra.mxu0 %v703
        %752 = vmatprep.subr.mxu0 0.0
        %753 = vmatpush1.msra.mxu0 %v702
        %754 = vmatprep.subr.mxu0 0.0
        %755 = vmatpush1.msra.mxu0 %v701
        %756 = vmatprep.subr.mxu0 0.0
        %757 = vmatpush2.msra.mxu0 0.0
        %758 = vmatprep.subr.mxu0 0.0
        %759 = vmatpush2.msra.mxu0 0.0
        %760 = vmatprep.subr.mxu0 0.0
        %761 = vmatpush2.msra.mxu0 0.0
        %762 = vmatprep.subr.mxu0 0.0
        %763 = vmatpush2.msra.mxu0 0.0
        %764 = vmatprep.subr.mxu0 0.0
        %765 = vmatpush2.msra.mxu0 0.0
        %766 = vmatprep.subr.mxu0 0.0
        %767 = vmatpush2.msra.mxu0 0.0
        %768 = vmatprep.subr.mxu0 0.0
        %769 = vmatpush2.msra.mxu0 0.0
        %770 = vmatprep.subr.mxu0 0.0
        %771 = vmatpush2.msra.mxu0 0.0
        %772 = vmatprep.subr.mxu0 0.0
        %773 = vmatpush2.msra.mxu0 0.0
        %774 = vmatprep.subr.mxu0 0.0
        %775 = vmatpush2.msra.mxu0 0.0
        %776 = vmatprep.subr.mxu0 0.0
        %777 = vmatpush2.msra.mxu0 0.0
        %778 = vmatprep.subr.mxu0 0.0
        %779 = vmatpush2.msra.mxu0 0.0
        %780 = vmatprep.subr.mxu0 0.0
        %781 = vmatpush2.msra.mxu0 0.0
        %782 = vmatprep.subr.mxu0 0.0
        %783 = vmatpush2.msra.mxu0 0.0
        %784 = vmatprep.subr.mxu0 0.0
        %785 = vmatpush2.msra.mxu0 0.0
        %786 = vmatprep.subr.mxu0 0.0
        %787 = vmatpush2.msra.mxu0 0.0
        %788 = vmatprep.mubr.f32.mxu0 0.0
        %789 = vmatmul.mubr.f32.gmra.mxu0 %v685
        %v790 = vpop.f32.mrf.mxu0
        %v791 = vadd.f32 %v722, %v790
        %v792 = vpop.f32.mrf.mxu0
        %793 = vmatprep.mubr.f32.mxu0 0.0
        %794 = vmatmul.mubr.f32.gmra.mxu0 %v686
        %v795 = vpop.f32.mrf.mxu0
        %v796 = vadd.f32 %v722, %v795
        %v797 = vpop.f32.mrf.mxu0
        %798 = vmatprep.mubr.f32.mxu0 0.0
        %799 = vmatmul.mubr.f32.gmra.mxu0 %v687
        %v800 = vpop.f32.mrf.mxu0
        %v801 = vadd.f32 %v722, %v800
        %v802 = vpop.f32.mrf.mxu0
        %803 = vmatprep.mubr.f32.mxu0 0.0
        %804 = vmatmul.mubr.f32.gmra.mxu0 %v688
        %v805 = vpop.f32.mrf.mxu0
        %v806 = vadd.f32 %v722, %v805
        %v807 = vpop.f32.mrf.mxu0
        %808 = vmatprep.mubr.f32.mxu0 0.0
        %809 = vmatmul.mubr.f32.gmra.mxu0 %v689
        %v810 = vpop.f32.mrf.mxu0
        %v811 = vadd.f32 %v722, %v810
        %v812 = vpop.f32.mrf.mxu0
        %813 = vmatprep.mubr.f32.mxu0 0.0
        %814 = vmatmul.mubr.f32.gmra.mxu0 %v690
        %v815 = vpop.f32.mrf.mxu0
        %v816 = vadd.f32 %v722, %v815
        %v817 = vpop.f32.mrf.mxu0
        %818 = vmatprep.mubr.f32.mxu0 0.0
        %819 = vmatmul.mubr.f32.gmra.mxu0 %v691
        %v820 = vpop.f32.mrf.mxu0
        %v821 = vadd.f32 %v722, %v820
        %v822 = vpop.f32.mrf.mxu0
        %823 = vmatprep.mubr.f32.mxu0 0.0
        %824 = vmatmul.mubr.f32.gmra.mxu0 %v692
        %v825 = vpop.f32.mrf.mxu0
        %v826 = vadd.f32 %v722, %v825
        %v827 = vpop.f32.mrf.mxu0
        %828 = vmatprep.mubr.f32.mxu0 0.0
        %829 = vmatmul.mubr.f32.gmra.mxu0 %v693
        %v830 = vpop.f32.mrf.mxu0
        %v831 = vadd.f32 %v722, %v830
        %v832 = vpop.f32.mrf.mxu0
        %833 = vmatprep.mubr.f32.mxu0 0.0
        %834 = vmatmul.mubr.f32.gmra.mxu0 %v694
        %v835 = vpop.f32.mrf.mxu0
        %v836 = vadd.f32 %v722, %v835
        %v837 = vpop.f32.mrf.mxu0
        %838 = vmatprep.mubr.f32.mxu0 0.0
        %839 = vmatmul.mubr.f32.gmra.mxu0 %v695
        %v840 = vpop.f32.mrf.mxu0
        %v841 = vadd.f32 %v722, %v840
        %v842 = vpop.f32.mrf.mxu0
        %843 = vmatprep.mubr.f32.mxu0 0.0
        %844 = vmatmul.mubr.f32.gmra.mxu0 %v696
        %v845 = vpop.f32.mrf.mxu0
        %v846 = vadd.f32 %v722, %v845
        %v847 = vpop.f32.mrf.mxu0
        %848 = vmatprep.mubr.f32.mxu0 0.0
        %849 = vmatmul.mubr.f32.gmra.mxu0 %v697
        %v850 = vpop.f32.mrf.mxu0
        %v851 = vadd.f32 %v722, %v850
        %v852 = vpop.f32.mrf.mxu0
        %853 = vmatprep.mubr.f32.mxu0 0.0
        %854 = vmatmul.mubr.f32.gmra.mxu0 %v698
        %v855 = vpop.f32.mrf.mxu0
        %v856 = vadd.f32 %v722, %v855
        %v857 = vpop.f32.mrf.mxu0
        %858 = vmatprep.mubr.f32.mxu0 0.0
        %859 = vmatmul.mubr.f32.gmra.mxu0 %v699
        %v860 = vpop.f32.mrf.mxu0
        %v861 = vadd.f32 %v722, %v860
        %v862 = vpop.f32.mrf.mxu0
        %863 = vmatprep.mubr.f32.mxu0 0.0
        %864 = vmatmul.mubr.f32.gmra.mxu0 %v700
        %v865 = vpop.f32.mrf.mxu0
        %v866 = vadd.f32 %v722, %v865
        %v867 = vpop.f32.mrf.mxu0
        %868 = vdwg.mxu0
        %v869 = vmax.f32 %v791, 0.0
        %v870 = vmax.f32 %v796, 0.0
        %v871 = vmax.f32 %v801, 0.0
        %v872 = vmax.f32 %v806, 0.0
        %v873 = vmax.f32 %v811, 0.0
        %v874 = vmax.f32 %v816, 0.0
        %v875 = vmax.f32 %v821, 0.0
        %v876 = vmax.f32 %v826, 0.0
        %v877 = vmax.f32 %v831, 0.0
        %v878 = vmax.f32 %v836, 0.0
        %v879 = vmax.f32 %v841, 0.0
        %v880 = vmax.f32 %v846, 0.0
        %v881 = vmax.f32 %v851, 0.0
        %v882 = vmax.f32 %v856, 0.0
        %v883 = vmax.f32 %v861, 0.0
        %v884 = vmax.f32 %v866, 0.0
        %vm885 = vcmask 523264
        %886 = vst.msk [vmem:[%s682] sm:$0xff] %vm885, %v869
        %887 = vst.msk [vmem:[%s682 + $0x18] sm:$0xff] %vm885, %v870
        %888 = vst.msk [vmem:[%s682 + $0x30] sm:$0xff] %vm885, %v871
        %889 = vst.msk [vmem:[%s682 + $0x48] sm:$0xff] %vm885, %v872
        %890 = vst.msk [vmem:[%s682 + $0x60] sm:$0xff] %vm885, %v873
        %891 = vst.msk [vmem:[%s682 + $0x78] sm:$0xff] %vm885, %v874
        %892 = vst.msk [vmem:[%s682 + $0x90] sm:$0xff] %vm885, %v875
        %893 = vst.msk [vmem:[%s682 + $0xa8] sm:$0xff] %vm885, %v876
        %894 = vst.msk [vmem:[%s682 + $0xc0] sm:$0xff] %vm885, %v877
        %895 = vst.msk [vmem:[%s682 + $0xd8] sm:$0xff] %vm885, %v878
        %896 = vst.msk [vmem:[%s682 + $0xf0] sm:$0xff] %vm885, %v879
        %897 = vst.msk [vmem:[%s682 + $0x108] sm:$0xff] %vm885, %v880
        %898 = vst.msk [vmem:[%s682 + $0x120] sm:$0xff] %vm885, %v881
        %899 = vst.msk [vmem:[%s682 + $0x138] sm:$0xff] %vm885, %v882
        %900 = vst.msk [vmem:[%s682 + $0x150] sm:$0xff] %vm885, %v883
        %901 = vst.msk [vmem:[%s682 + $0x168] sm:$0xff] %vm885, %v884
        %v902 = vld [vmem:[#allocation7] sm:$0xff]
        %v903 = vld [vmem:[#allocation7 + $0x8] sm:$0xff]
        %v904 = vld [vmem:[#allocation7 + $0x10] sm:$0xff]
        %v905 = vld [vmem:[#allocation7 + $0x18] sm:$0xff]
        %v906 = vld [vmem:[#allocation7 + $0x20] sm:$0xff]
        %v907 = vld [vmem:[#allocation7 + $0x28] sm:$0xff]
        %v908 = vld [vmem:[#allocation7 + $0x30] sm:$0xff]
        %v909 = vld [vmem:[#allocation7 + $0x38] sm:$0xff]
        %v910 = vld [vmem:[#allocation7 + $0x40] sm:$0xff]
        %v911 = vld [vmem:[#allocation7 + $0x48] sm:$0xff]
        %v912 = vld [vmem:[#allocation7 + $0x50] sm:$0xff]
        %v913 = vld [vmem:[#allocation7 + $0x58] sm:$0xff]
        %v914 = vld [vmem:[#allocation7 + $0x60] sm:$0xff]
        %v915 = vld [vmem:[#allocation7 + $0x68] sm:$0xff]
        %v916 = vld [vmem:[#allocation7 + $0x70] sm:$0xff]
        %v917 = vld [vmem:[#allocation7 + $0x78] sm:$0xff]
        %v918 = vld [vmem:[%s4] sm:$0x1]
        %v920 = vlaneseq
        %v921 = vshrl.u32 %v920, 7
        %v922 = vsub.s32 0, %v921
        %v923 = vrot.slane %v918, %v922
        %925 = vmatprep.subr.mxu0 0.0
        %926 = vmatpush1.msra.mxu0 %v917
        %927 = vmatprep.subr.mxu0 0.0
        %928 = vmatpush1.msra.mxu0 %v916
        %929 = vmatprep.subr.mxu0 0.0
        %930 = vmatpush1.msra.mxu0 %v915
        %931 = vmatprep.subr.mxu0 0.0
        %932 = vmatpush1.msra.mxu0 %v914
        %933 = vmatprep.subr.mxu0 0.0
        %934 = vmatpush1.msra.mxu0 %v913
        %935 = vmatprep.subr.mxu0 0.0
        %936 = vmatpush1.msra.mxu0 %v912
        %937 = vmatprep.subr.mxu0 0.0
        %938 = vmatpush1.msra.mxu0 %v911
        %939 = vmatprep.subr.mxu0 0.0
        %940 = vmatpush1.msra.mxu0 %v910
        %941 = vmatprep.subr.mxu0 0.0
        %942 = vmatpush1.msra.mxu0 %v909
        %943 = vmatprep.subr.mxu0 0.0
        %944 = vmatpush1.msra.mxu0 %v908
        %945 = vmatprep.subr.mxu0 0.0
        %946 = vmatpush1.msra.mxu0 %v907
        %947 = vmatprep.subr.mxu0 0.0
        %948 = vmatpush1.msra.mxu0 %v906
        %949 = vmatprep.subr.mxu0 0.0
        %950 = vmatpush1.msra.mxu0 %v905
        %951 = vmatprep.subr.mxu0 0.0
        %952 = vmatpush1.msra.mxu0 %v904
        %953 = vmatprep.subr.mxu0 0.0
        %954 = vmatpush1.msra.mxu0 %v903
        %955 = vmatprep.subr.mxu0 0.0
        %956 = vmatpush1.msra.mxu0 %v902
        %957 = vmatprep.subr.mxu0 0.0
        %958 = vmatpush2.msra.mxu0 0.0
        %959 = vmatprep.subr.mxu0 0.0
        %960 = vmatpush2.msra.mxu0 0.0
        %961 = vmatprep.subr.mxu0 0.0
        %962 = vmatpush2.msra.mxu0 0.0
        %963 = vmatprep.subr.mxu0 0.0
        %964 = vmatpush2.msra.mxu0 0.0
        %965 = vmatprep.subr.mxu0 0.0
        %966 = vmatpush2.msra.mxu0 0.0
        %967 = vmatprep.subr.mxu0 0.0
        %968 = vmatpush2.msra.mxu0 0.0
        %969 = vmatprep.subr.mxu0 0.0
        %970 = vmatpush2.msra.mxu0 0.0
        %971 = vmatprep.subr.mxu0 0.0
        %972 = vmatpush2.msra.mxu0 0.0
        %973 = vmatprep.subr.mxu0 0.0
        %974 = vmatpush2.msra.mxu0 0.0
        %975 = vmatprep.subr.mxu0 0.0
        %976 = vmatpush2.msra.mxu0 0.0
        %977 = vmatprep.subr.mxu0 0.0
        %978 = vmatpush2.msra.mxu0 0.0
        %979 = vmatprep.subr.mxu0 0.0
        %980 = vmatpush2.msra.mxu0 0.0
        %981 = vmatprep.subr.mxu0 0.0
        %982 = vmatpush2.msra.mxu0 0.0
        %983 = vmatprep.subr.mxu0 0.0
        %984 = vmatpush2.msra.mxu0 0.0
        %985 = vmatprep.subr.mxu0 0.0
        %986 = vmatpush2.msra.mxu0 0.0
        %987 = vmatprep.subr.mxu0 0.0
        %988 = vmatpush2.msra.mxu0 0.0
        %989 = vmatprep.mubr.f32.mxu0 0.0
        %990 = vmatmul.mubr.f32.gmra.mxu0 %v869
        %v991 = vpop.f32.mrf.mxu0
        %v992 = vadd.f32 %v923, %v991
        %v993 = vpop.f32.mrf.mxu0
        %994 = vmatprep.mubr.f32.mxu0 0.0
        %995 = vmatmul.mubr.f32.gmra.mxu0 %v870
        %v996 = vpop.f32.mrf.mxu0
        %v997 = vadd.f32 %v923, %v996
        %v998 = vpop.f32.mrf.mxu0
        %999 = vmatprep.mubr.f32.mxu0 0.0
        %1000 = vmatmul.mubr.f32.gmra.mxu0 %v871
        %v1001 = vpop.f32.mrf.mxu0
        %v1002 = vadd.f32 %v923, %v1001
        %v1003 = vpop.f32.mrf.mxu0
        %1004 = vmatprep.mubr.f32.mxu0 0.0
        %1005 = vmatmul.mubr.f32.gmra.mxu0 %v872
        %v1006 = vpop.f32.mrf.mxu0
        %v1007 = vadd.f32 %v923, %v1006
        %v1008 = vpop.f32.mrf.mxu0
        %1009 = vmatprep.mubr.f32.mxu0 0.0
        %1010 = vmatmul.mubr.f32.gmra.mxu0 %v873
        %v1011 = vpop.f32.mrf.mxu0
        %v1012 = vadd.f32 %v923, %v1011
        %v1013 = vpop.f32.mrf.mxu0
        %1014 = vmatprep.mubr.f32.mxu0 0.0
        %1015 = vmatmul.mubr.f32.gmra.mxu0 %v874
        %v1016 = vpop.f32.mrf.mxu0
        %v1017 = vadd.f32 %v923, %v1016
        %v1018 = vpop.f32.mrf.mxu0
        %1019 = vmatprep.mubr.f32.mxu0 0.0
        %1020 = vmatmul.mubr.f32.gmra.mxu0 %v875
        %v1021 = vpop.f32.mrf.mxu0
        %v1022 = vadd.f32 %v923, %v1021
        %v1023 = vpop.f32.mrf.mxu0
        %1024 = vmatprep.mubr.f32.mxu0 0.0
        %1025 = vmatmul.mubr.f32.gmra.mxu0 %v876
        %v1026 = vpop.f32.mrf.mxu0
        %v1027 = vadd.f32 %v923, %v1026
        %v1028 = vpop.f32.mrf.mxu0
        %1029 = vmatprep.mubr.f32.mxu0 0.0
        %1030 = vmatmul.mubr.f32.gmra.mxu0 %v877
        %v1031 = vpop.f32.mrf.mxu0
        %v1032 = vadd.f32 %v923, %v1031
        %v1033 = vpop.f32.mrf.mxu0
        %1034 = vmatprep.mubr.f32.mxu0 0.0
        %1035 = vmatmul.mubr.f32.gmra.mxu0 %v878
        %v1036 = vpop.f32.mrf.mxu0
        %v1037 = vadd.f32 %v923, %v1036
        %v1038 = vpop.f32.mrf.mxu0
        %1039 = vmatprep.mubr.f32.mxu0 0.0
        %1040 = vmatmul.mubr.f32.gmra.mxu0 %v879
        %v1041 = vpop.f32.mrf.mxu0
        %v1042 = vadd.f32 %v923, %v1041
        %v1043 = vpop.f32.mrf.mxu0
        %1044 = vmatprep.mubr.f32.mxu0 0.0
        %1045 = vmatmul.mubr.f32.gmra.mxu0 %v880
        %v1046 = vpop.f32.mrf.mxu0
        %v1047 = vadd.f32 %v923, %v1046
        %v1048 = vpop.f32.mrf.mxu0
        %1049 = vmatprep.mubr.f32.mxu0 0.0
        %1050 = vmatmul.mubr.f32.gmra.mxu0 %v881
        %v1051 = vpop.f32.mrf.mxu0
        %v1052 = vadd.f32 %v923, %v1051
        %v1053 = vpop.f32.mrf.mxu0
        %1054 = vmatprep.mubr.f32.mxu0 0.0
        %1055 = vmatmul.mubr.f32.gmra.mxu0 %v882
        %v1056 = vpop.f32.mrf.mxu0
        %v1057 = vadd.f32 %v923, %v1056
        %v1058 = vpop.f32.mrf.mxu0
        %1059 = vmatprep.mubr.f32.mxu0 0.0
        %1060 = vmatmul.mubr.f32.gmra.mxu0 %v883
        %v1061 = vpop.f32.mrf.mxu0
        %v1062 = vadd.f32 %v923, %v1061
        %v1063 = vpop.f32.mrf.mxu0
        %1064 = vmatprep.mubr.f32.mxu0 0.0
        %1065 = vmatmul.mubr.f32.gmra.mxu0 %v884
        %v1066 = vpop.f32.mrf.mxu0
        %v1067 = vadd.f32 %v923, %v1066
        %v1068 = vpop.f32.mrf.mxu0
        %1069 = vdwg.mxu0
        %v1070 = vmax.f32 %v992, 0.0
        %v1071 = vmax.f32 %v997, 0.0
        %v1072 = vmax.f32 %v1002, 0.0
        %v1073 = vmax.f32 %v1007, 0.0
        %v1074 = vmax.f32 %v1012, 0.0
        %v1075 = vmax.f32 %v1017, 0.0
        %v1076 = vmax.f32 %v1022, 0.0
        %v1077 = vmax.f32 %v1027, 0.0
        %v1078 = vmax.f32 %v1032, 0.0
        %v1079 = vmax.f32 %v1037, 0.0
        %v1080 = vmax.f32 %v1042, 0.0
        %v1081 = vmax.f32 %v1047, 0.0
        %v1082 = vmax.f32 %v1052, 0.0
        %v1083 = vmax.f32 %v1057, 0.0
        %v1084 = vmax.f32 %v1062, 0.0
        %v1085 = vmax.f32 %v1067, 0.0
        %1102 = vrot.lane.b32.xlu0 %v1070, 64
        %v1103 = vpop.permute.xlu0 %1102
        %1104 = vrot.lane.b32.xlu0 %v1071, 64
        %v1105 = vpop.permute.xlu0 %1104
        %1106 = vrot.lane.b32.xlu0 %v1072, 64
        %v1107 = vpop.permute.xlu0 %1106
        %1108 = vrot.lane.b32.xlu0 %v1073, 64
        %v1109 = vpop.permute.xlu0 %1108
        %1110 = vrot.lane.b32.xlu0 %v1074, 64
        %v1111 = vpop.permute.xlu0 %1110
        %1112 = vrot.lane.b32.xlu0 %v1075, 64
        %v1113 = vpop.permute.xlu0 %1112
        %1114 = vrot.lane.b32.xlu0 %v1076, 64
        %v1115 = vpop.permute.xlu0 %1114
        %1116 = vrot.lane.b32.xlu0 %v1077, 64
        %v1117 = vpop.permute.xlu0 %1116
        %1118 = vrot.lane.b32.xlu0 %v1078, 64
        %v1119 = vpop.permute.xlu0 %1118
        %1120 = vrot.lane.b32.xlu0 %v1079, 64
        %v1121 = vpop.permute.xlu0 %1120
        %1122 = vrot.lane.b32.xlu0 %v1080, 64
        %v1123 = vpop.permute.xlu0 %1122
        %1124 = vrot.lane.b32.xlu0 %v1081, 64
        %v1125 = vpop.permute.xlu0 %1124
        %1126 = vrot.lane.b32.xlu0 %v1082, 64
        %v1127 = vpop.permute.xlu0 %1126
        %1128 = vrot.lane.b32.xlu0 %v1083, 64
        %v1129 = vpop.permute.xlu0 %1128
        %1130 = vrot.lane.b32.xlu0 %v1084, 64
        %v1131 = vpop.permute.xlu0 %1130
        %1132 = vrot.lane.b32.xlu0 %v1085, 64
        %v1133 = vpop.permute.xlu0 %1132
        %vm1150 = vcmask 1048064
        %1151 = vst.msk [vmem:[%s682] sm:$0xff] %vm1150, %v1103
        %1152 = vst.msk [vmem:[%s682 + $0x18] sm:$0xff] %vm1150, %v1105
        %1153 = vst.msk [vmem:[%s682 + $0x30] sm:$0xff] %vm1150, %v1107
        %1154 = vst.msk [vmem:[%s682 + $0x48] sm:$0xff] %vm1150, %v1109
        %1155 = vst.msk [vmem:[%s682 + $0x60] sm:$0xff] %vm1150, %v1111
        %1156 = vst.msk [vmem:[%s682 + $0x78] sm:$0xff] %vm1150, %v1113
        %1157 = vst.msk [vmem:[%s682 + $0x90] sm:$0xff] %vm1150, %v1115
        %1158 = vst.msk [vmem:[%s682 + $0xa8] sm:$0xff] %vm1150, %v1117
        %1159 = vst.msk [vmem:[%s682 + $0xc0] sm:$0xff] %vm1150, %v1119
        %1160 = vst.msk [vmem:[%s682 + $0xd8] sm:$0xff] %vm1150, %v1121
        %1161 = vst.msk [vmem:[%s682 + $0xf0] sm:$0xff] %vm1150, %v1123
        %1162 = vst.msk [vmem:[%s682 + $0x108] sm:$0xff] %vm1150, %v1125
        %1163 = vst.msk [vmem:[%s682 + $0x120] sm:$0xff] %vm1150, %v1127
        %1164 = vst.msk [vmem:[%s682 + $0x138] sm:$0xff] %vm1150, %v1129
        %1165 = vst.msk [vmem:[%s682 + $0x150] sm:$0xff] %vm1150, %v1131
        %1166 = vst.msk [vmem:[%s682 + $0x168] sm:$0xff] %vm1150, %v1133
        %v1167 = vld [vmem:[#allocation8] sm:$0xff]
        %v1168 = vld [vmem:[#allocation8 + $0x8] sm:$0xff]
        %v1169 = vld [vmem:[#allocation8 + $0x10] sm:$0xff]
        %v1170 = vld [vmem:[#allocation8 + $0x18] sm:$0xff]
        %v1171 = vld [vmem:[#allocation8 + $0x20] sm:$0xff]
        %v1172 = vld [vmem:[#allocation8 + $0x28] sm:$0xff]
        %v1173 = vld [vmem:[#allocation8 + $0x30] sm:$0xff]
        %v1174 = vld [vmem:[#allocation8 + $0x38] sm:$0xff]
        %v1175 = vld [vmem:[#allocation8 + $0x40] sm:$0xff]
        %v1176 = vld [vmem:[#allocation8 + $0x48] sm:$0xff]
        %v1177 = vld [vmem:[#allocation8 + $0x50] sm:$0xff]
        %v1178 = vld [vmem:[#allocation8 + $0x58] sm:$0xff]
        %v1179 = vld [vmem:[#allocation8 + $0x60] sm:$0xff]
        %v1180 = vld [vmem:[#allocation8 + $0x68] sm:$0xff]
        %v1181 = vld [vmem:[#allocation8 + $0x70] sm:$0xff]
        %v1182 = vld [vmem:[#allocation8 + $0x78] sm:$0xff]
        %v1183 = vld [vmem:[%s6] sm:$0x1]
        %v1185 = vlaneseq
        %v1186 = vshrl.u32 %v1185, 7
        %v1187 = vsub.s32 0, %v1186
        %v1188 = vrot.slane %v1183, %v1187
        %1190 = vmatprep.subr.mxu0 0.0
        %1191 = vmatpush1.msra.mxu0 %v1182
        %1192 = vmatprep.subr.mxu0 0.0
        %1193 = vmatpush1.msra.mxu0 %v1181
        %1194 = vmatprep.subr.mxu0 0.0
        %1195 = vmatpush1.msra.mxu0 %v1180
        %1196 = vmatprep.subr.mxu0 0.0
        %1197 = vmatpush1.msra.mxu0 %v1179
        %1198 = vmatprep.subr.mxu0 0.0
        %1199 = vmatpush1.msra.mxu0 %v1178
        %1200 = vmatprep.subr.mxu0 0.0
        %1201 = vmatpush1.msra.mxu0 %v1177
        %1202 = vmatprep.subr.mxu0 0.0
        %1203 = vmatpush1.msra.mxu0 %v1176
        %1204 = vmatprep.subr.mxu0 0.0
        %1205 = vmatpush1.msra.mxu0 %v1175
        %1206 = vmatprep.subr.mxu0 0.0
        %1207 = vmatpush1.msra.mxu0 %v1174
        %1208 = vmatprep.subr.mxu0 0.0
        %1209 = vmatpush1.msra.mxu0 %v1173
        %1210 = vmatprep.subr.mxu0 0.0
        %1211 = vmatpush1.msra.mxu0 %v1172
        %1212 = vmatprep.subr.mxu0 0.0
        %1213 = vmatpush1.msra.mxu0 %v1171
        %1214 = vmatprep.subr.mxu0 0.0
        %1215 = vmatpush1.msra.mxu0 %v1170
        %1216 = vmatprep.subr.mxu0 0.0
        %1217 = vmatpush1.msra.mxu0 %v1169
        %1218 = vmatprep.subr.mxu0 0.0
        %1219 = vmatpush1.msra.mxu0 %v1168
        %1220 = vmatprep.subr.mxu0 0.0
        %1221 = vmatpush1.msra.mxu0 %v1167
        %1222 = vmatprep.subr.mxu0 0.0
        %1223 = vmatpush2.msra.mxu0 0.0
        %1224 = vmatprep.subr.mxu0 0.0
        %1225 = vmatpush2.msra.mxu0 0.0
        %1226 = vmatprep.subr.mxu0 0.0
        %1227 = vmatpush2.msra.mxu0 0.0
        %1228 = vmatprep.subr.mxu0 0.0
        %1229 = vmatpush2.msra.mxu0 0.0
        %1230 = vmatprep.subr.mxu0 0.0
        %1231 = vmatpush2.msra.mxu0 0.0
        %1232 = vmatprep.subr.mxu0 0.0
        %1233 = vmatpush2.msra.mxu0 0.0
        %1234 = vmatprep.subr.mxu0 0.0
        %1235 = vmatpush2.msra.mxu0 0.0
        %1236 = vmatprep.subr.mxu0 0.0
        %1237 = vmatpush2.msra.mxu0 0.0
        %1238 = vmatprep.subr.mxu0 0.0
        %1239 = vmatpush2.msra.mxu0 0.0
        %1240 = vmatprep.subr.mxu0 0.0
        %1241 = vmatpush2.msra.mxu0 0.0
        %1242 = vmatprep.subr.mxu0 0.0
        %1243 = vmatpush2.msra.mxu0 0.0
        %1244 = vmatprep.subr.mxu0 0.0
        %1245 = vmatpush2.msra.mxu0 0.0
        %1246 = vmatprep.subr.mxu0 0.0
        %1247 = vmatpush2.msra.mxu0 0.0
        %1248 = vmatprep.subr.mxu0 0.0
        %1249 = vmatpush2.msra.mxu0 0.0
        %1250 = vmatprep.subr.mxu0 0.0
        %1251 = vmatpush2.msra.mxu0 0.0
        %1252 = vmatprep.subr.mxu0 0.0
        %1253 = vmatpush2.msra.mxu0 0.0
        %1254 = vmatprep.mubr.f32.mxu0 0.0
        %1255 = vmatmul.mubr.f32.gmra.mxu0 %v1070
        %v1256 = vpop.f32.mrf.mxu0
        %v1257 = vadd.f32 %v1188, %v1256
        %v1258 = vpop.f32.mrf.mxu0
        %1259 = vmatprep.mubr.f32.mxu0 0.0
        %1260 = vmatmul.mubr.f32.gmra.mxu0 %v1071
        %v1261 = vpop.f32.mrf.mxu0
        %v1262 = vadd.f32 %v1188, %v1261
        %v1263 = vpop.f32.mrf.mxu0
        %1264 = vmatprep.mubr.f32.mxu0 0.0
        %1265 = vmatmul.mubr.f32.gmra.mxu0 %v1072
        %v1266 = vpop.f32.mrf.mxu0
        %v1267 = vadd.f32 %v1188, %v1266
        %v1268 = vpop.f32.mrf.mxu0
        %1269 = vmatprep.mubr.f32.mxu0 0.0
        %1270 = vmatmul.mubr.f32.gmra.mxu0 %v1073
        %v1271 = vpop.f32.mrf.mxu0
        %v1272 = vadd.f32 %v1188, %v1271
        %v1273 = vpop.f32.mrf.mxu0
        %1274 = vmatprep.mubr.f32.mxu0 0.0
        %1275 = vmatmul.mubr.f32.gmra.mxu0 %v1074
        %v1276 = vpop.f32.mrf.mxu0
        %v1277 = vadd.f32 %v1188, %v1276
        %v1278 = vpop.f32.mrf.mxu0
        %1279 = vmatprep.mubr.f32.mxu0 0.0
        %1280 = vmatmul.mubr.f32.gmra.mxu0 %v1075
        %v1281 = vpop.f32.mrf.mxu0
        %v1282 = vadd.f32 %v1188, %v1281
        %v1283 = vpop.f32.mrf.mxu0
        %1284 = vmatprep.mubr.f32.mxu0 0.0
        %1285 = vmatmul.mubr.f32.gmra.mxu0 %v1076
        %v1286 = vpop.f32.mrf.mxu0
        %v1287 = vadd.f32 %v1188, %v1286
        %v1288 = vpop.f32.mrf.mxu0
        %1289 = vmatprep.mubr.f32.mxu0 0.0
        %1290 = vmatmul.mubr.f32.gmra.mxu0 %v1077
        %v1291 = vpop.f32.mrf.mxu0
        %v1292 = vadd.f32 %v1188, %v1291
        %v1293 = vpop.f32.mrf.mxu0
        %1294 = vmatprep.mubr.f32.mxu0 0.0
        %1295 = vmatmul.mubr.f32.gmra.mxu0 %v1078
        %v1296 = vpop.f32.mrf.mxu0
        %v1297 = vadd.f32 %v1188, %v1296
        %v1298 = vpop.f32.mrf.mxu0
        %1299 = vmatprep.mubr.f32.mxu0 0.0
        %1300 = vmatmul.mubr.f32.gmra.mxu0 %v1079
        %v1301 = vpop.f32.mrf.mxu0
        %v1302 = vadd.f32 %v1188, %v1301
        %v1303 = vpop.f32.mrf.mxu0
        %1304 = vmatprep.mubr.f32.mxu0 0.0
        %1305 = vmatmul.mubr.f32.gmra.mxu0 %v1080
        %v1306 = vpop.f32.mrf.mxu0
        %v1307 = vadd.f32 %v1188, %v1306
        %v1308 = vpop.f32.mrf.mxu0
        %1309 = vmatprep.mubr.f32.mxu0 0.0
        %1310 = vmatmul.mubr.f32.gmra.mxu0 %v1081
        %v1311 = vpop.f32.mrf.mxu0
        %v1312 = vadd.f32 %v1188, %v1311
        %v1313 = vpop.f32.mrf.mxu0
        %1314 = vmatprep.mubr.f32.mxu0 0.0
        %1315 = vmatmul.mubr.f32.gmra.mxu0 %v1082
        %v1316 = vpop.f32.mrf.mxu0
        %v1317 = vadd.f32 %v1188, %v1316
        %v1318 = vpop.f32.mrf.mxu0
        %1319 = vmatprep.mubr.f32.mxu0 0.0
        %1320 = vmatmul.mubr.f32.gmra.mxu0 %v1083
        %v1321 = vpop.f32.mrf.mxu0
        %v1322 = vadd.f32 %v1188, %v1321
        %v1323 = vpop.f32.mrf.mxu0
        %1324 = vmatprep.mubr.f32.mxu0 0.0
        %1325 = vmatmul.mubr.f32.gmra.mxu0 %v1084
        %v1326 = vpop.f32.mrf.mxu0
        %v1327 = vadd.f32 %v1188, %v1326
        %v1328 = vpop.f32.mrf.mxu0
        %1329 = vmatprep.mubr.f32.mxu0 0.0
        %1330 = vmatmul.mubr.f32.gmra.mxu0 %v1085
        %v1331 = vpop.f32.mrf.mxu0
        %v1332 = vadd.f32 %v1188, %v1331
        %v1333 = vpop.f32.mrf.mxu0
        %1334 = vdwg.mxu0
        %v1335 = vmax.f32 %v1257, 0.0
        %v1336 = vmax.f32 %v1262, 0.0
        %v1337 = vmax.f32 %v1267, 0.0
        %v1338 = vmax.f32 %v1272, 0.0
        %v1339 = vmax.f32 %v1277, 0.0
        %v1340 = vmax.f32 %v1282, 0.0
        %v1341 = vmax.f32 %v1287, 0.0
        %v1342 = vmax.f32 %v1292, 0.0
        %v1343 = vmax.f32 %v1297, 0.0
        %v1344 = vmax.f32 %v1302, 0.0
        %v1345 = vmax.f32 %v1307, 0.0
        %v1346 = vmax.f32 %v1312, 0.0
        %v1347 = vmax.f32 %v1317, 0.0
        %v1348 = vmax.f32 %v1322, 0.0
        %v1349 = vmax.f32 %v1327, 0.0
        %v1350 = vmax.f32 %v1332, 0.0
        %1351 = vst [vmem:[%s682 + $0x8] sm:$0xff] %v1335
        %1352 = vst [vmem:[%s682 + $0x20] sm:$0xff] %v1336
        %1353 = vst [vmem:[%s682 + $0x38] sm:$0xff] %v1337
        %1354 = vst [vmem:[%s682 + $0x50] sm:$0xff] %v1338
        %1355 = vst [vmem:[%s682 + $0x68] sm:$0xff] %v1339
        %1356 = vst [vmem:[%s682 + $0x80] sm:$0xff] %v1340
        %1357 = vst [vmem:[%s682 + $0x98] sm:$0xff] %v1341
        %1358 = vst [vmem:[%s682 + $0xb0] sm:$0xff] %v1342
        %1359 = vst [vmem:[%s682 + $0xc8] sm:$0xff] %v1343
        %1360 = vst [vmem:[%s682 + $0xe0] sm:$0xff] %v1344
        %1361 = vst [vmem:[%s682 + $0xf8] sm:$0xff] %v1345
        %1362 = vst [vmem:[%s682 + $0x110] sm:$0xff] %v1346
        %1363 = vst [vmem:[%s682 + $0x128] sm:$0xff] %v1347
        %1364 = vst [vmem:[%s682 + $0x140] sm:$0xff] %v1348
        %1365 = vst [vmem:[%s682 + $0x158] sm:$0xff] %v1349
        %1366 = vst [vmem:[%s682 + $0x170] sm:$0xff] %v1350
        %v1367 = vld [vmem:[#allocation10] sm:$0xff]
        %v1368 = vld [vmem:[#allocation10 + $0x8] sm:$0xff]
        %v1369 = vld [vmem:[#allocation10 + $0x10] sm:$0xff]
        %v1370 = vld [vmem:[#allocation10 + $0x18] sm:$0xff]
        %v1371 = vld [vmem:[#allocation10 + $0x20] sm:$0xff]
        %v1372 = vld [vmem:[#allocation10 + $0x28] sm:$0xff]
        %v1373 = vld [vmem:[#allocation10 + $0x30] sm:$0xff]
        %v1374 = vld [vmem:[#allocation10 + $0x38] sm:$0xff]
        %v1375 = vld [vmem:[#allocation10 + $0x40] sm:$0xff]
        %v1376 = vld [vmem:[#allocation10 + $0x48] sm:$0xff]
        %v1377 = vld [vmem:[#allocation10 + $0x50] sm:$0xff]
        %v1378 = vld [vmem:[#allocation10 + $0x58] sm:$0xff]
        %v1379 = vld [vmem:[#allocation10 + $0x60] sm:$0xff]
        %v1380 = vld [vmem:[#allocation10 + $0x68] sm:$0xff]
        %v1381 = vld [vmem:[#allocation10 + $0x70] sm:$0xff]
        %v1382 = vld [vmem:[#allocation10 + $0x78] sm:$0xff]
        %v1383 = vld [vmem:[%s8] sm:$0x1]
        %v1385 = vlaneseq
        %v1386 = vshrl.u32 %v1385, 7
        %v1387 = vsub.s32 0, %v1386
        %v1388 = vrot.slane %v1383, %v1387
        %1390 = vmatprep.subr.mxu0 0.0
        %1391 = vmatpush1.msra.mxu0 %v1382
        %1392 = vmatprep.subr.mxu0 0.0
        %1393 = vmatpush1.msra.mxu0 %v1381
        %1394 = vmatprep.subr.mxu0 0.0
        %1395 = vmatpush1.msra.mxu0 %v1380
        %1396 = vmatprep.subr.mxu0 0.0
        %1397 = vmatpush1.msra.mxu0 %v1379
        %1398 = vmatprep.subr.mxu0 0.0
        %1399 = vmatpush1.msra.mxu0 %v1378
        %1400 = vmatprep.subr.mxu0 0.0
        %1401 = vmatpush1.msra.mxu0 %v1377
        %1402 = vmatprep.subr.mxu0 0.0
        %1403 = vmatpush1.msra.mxu0 %v1376
        %1404 = vmatprep.subr.mxu0 0.0
        %1405 = vmatpush1.msra.mxu0 %v1375
        %1406 = vmatprep.subr.mxu0 0.0
        %1407 = vmatpush1.msra.mxu0 %v1374
        %1408 = vmatprep.subr.mxu0 0.0
        %1409 = vmatpush1.msra.mxu0 %v1373
        %1410 = vmatprep.subr.mxu0 0.0
        %1411 = vmatpush1.msra.mxu0 %v1372
        %1412 = vmatprep.subr.mxu0 0.0
        %1413 = vmatpush1.msra.mxu0 %v1371
        %1414 = vmatprep.subr.mxu0 0.0
        %1415 = vmatpush1.msra.mxu0 %v1370
        %1416 = vmatprep.subr.mxu0 0.0
        %1417 = vmatpush1.msra.mxu0 %v1369
        %1418 = vmatprep.subr.mxu0 0.0
        %1419 = vmatpush1.msra.mxu0 %v1368
        %1420 = vmatprep.subr.mxu0 0.0
        %1421 = vmatpush1.msra.mxu0 %v1367
        %1422 = vmatprep.subr.mxu0 0.0
        %1423 = vmatpush2.msra.mxu0 0.0
        %1424 = vmatprep.subr.mxu0 0.0
        %1425 = vmatpush2.msra.mxu0 0.0
        %1426 = vmatprep.subr.mxu0 0.0
        %1427 = vmatpush2.msra.mxu0 0.0
        %1428 = vmatprep.subr.mxu0 0.0
        %1429 = vmatpush2.msra.mxu0 0.0
        %1430 = vmatprep.subr.mxu0 0.0
        %1431 = vmatpush2.msra.mxu0 0.0
        %1432 = vmatprep.subr.mxu0 0.0
        %1433 = vmatpush2.msra.mxu0 0.0
        %1434 = vmatprep.subr.mxu0 0.0
        %1435 = vmatpush2.msra.mxu0 0.0
        %1436 = vmatprep.subr.mxu0 0.0
        %1437 = vmatpush2.msra.mxu0 0.0
        %1438 = vmatprep.subr.mxu0 0.0
        %1439 = vmatpush2.msra.mxu0 0.0
        %1440 = vmatprep.subr.mxu0 0.0
        %1441 = vmatpush2.msra.mxu0 0.0
        %1442 = vmatprep.subr.mxu0 0.0
        %1443 = vmatpush2.msra.mxu0 0.0
        %1444 = vmatprep.subr.mxu0 0.0
        %1445 = vmatpush2.msra.mxu0 0.0
        %1446 = vmatprep.subr.mxu0 0.0
        %1447 = vmatpush2.msra.mxu0 0.0
        %1448 = vmatprep.subr.mxu0 0.0
        %1449 = vmatpush2.msra.mxu0 0.0
        %1450 = vmatprep.subr.mxu0 0.0
        %1451 = vmatpush2.msra.mxu0 0.0
        %1452 = vmatprep.subr.mxu0 0.0
        %1453 = vmatpush2.msra.mxu0 0.0
        %1454 = vmatprep.mubr.f32.mxu0 0.0
        %1455 = vmatmul.mubr.f32.gmra.mxu0 %v1335
        %v1456 = vpop.f32.mrf.mxu0
        %v1457 = vadd.f32 %v1388, %v1456
        %v1458 = vpop.f32.mrf.mxu0
        %1459 = vmatprep.mubr.f32.mxu0 0.0
        %1460 = vmatmul.mubr.f32.gmra.mxu0 %v1336
        %v1461 = vpop.f32.mrf.mxu0
        %v1462 = vadd.f32 %v1388, %v1461
        %v1463 = vpop.f32.mrf.mxu0
        %1464 = vmatprep.mubr.f32.mxu0 0.0
        %1465 = vmatmul.mubr.f32.gmra.mxu0 %v1337
        %v1466 = vpop.f32.mrf.mxu0
        %v1467 = vadd.f32 %v1388, %v1466
        %v1468 = vpop.f32.mrf.mxu0
        %1469 = vmatprep.mubr.f32.mxu0 0.0
        %1470 = vmatmul.mubr.f32.gmra.mxu0 %v1338
        %v1471 = vpop.f32.mrf.mxu0
        %v1472 = vadd.f32 %v1388, %v1471
        %v1473 = vpop.f32.mrf.mxu0
        %1474 = vmatprep.mubr.f32.mxu0 0.0
        %1475 = vmatmul.mubr.f32.gmra.mxu0 %v1339
        %v1476 = vpop.f32.mrf.mxu0
        %v1477 = vadd.f32 %v1388, %v1476
        %v1478 = vpop.f32.mrf.mxu0
        %1479 = vmatprep.mubr.f32.mxu0 0.0
        %1480 = vmatmul.mubr.f32.gmra.mxu0 %v1340
        %v1481 = vpop.f32.mrf.mxu0
        %v1482 = vadd.f32 %v1388, %v1481
        %v1483 = vpop.f32.mrf.mxu0
        %1484 = vmatprep.mubr.f32.mxu0 0.0
        %1485 = vmatmul.mubr.f32.gmra.mxu0 %v1341
        %v1486 = vpop.f32.mrf.mxu0
        %v1487 = vadd.f32 %v1388, %v1486
        %v1488 = vpop.f32.mrf.mxu0
        %1489 = vmatprep.mubr.f32.mxu0 0.0
        %1490 = vmatmul.mubr.f32.gmra.mxu0 %v1342
        %v1491 = vpop.f32.mrf.mxu0
        %v1492 = vadd.f32 %v1388, %v1491
        %v1493 = vpop.f32.mrf.mxu0
        %1494 = vmatprep.mubr.f32.mxu0 0.0
        %1495 = vmatmul.mubr.f32.gmra.mxu0 %v1343
        %v1496 = vpop.f32.mrf.mxu0
        %v1497 = vadd.f32 %v1388, %v1496
        %v1498 = vpop.f32.mrf.mxu0
        %1499 = vmatprep.mubr.f32.mxu0 0.0
        %1500 = vmatmul.mubr.f32.gmra.mxu0 %v1344
        %v1501 = vpop.f32.mrf.mxu0
        %v1502 = vadd.f32 %v1388, %v1501
        %v1503 = vpop.f32.mrf.mxu0
        %1504 = vmatprep.mubr.f32.mxu0 0.0
        %1505 = vmatmul.mubr.f32.gmra.mxu0 %v1345
        %v1506 = vpop.f32.mrf.mxu0
        %v1507 = vadd.f32 %v1388, %v1506
        %v1508 = vpop.f32.mrf.mxu0
        %1509 = vmatprep.mubr.f32.mxu0 0.0
        %1510 = vmatmul.mubr.f32.gmra.mxu0 %v1346
        %v1511 = vpop.f32.mrf.mxu0
        %v1512 = vadd.f32 %v1388, %v1511
        %v1513 = vpop.f32.mrf.mxu0
        %1514 = vmatprep.mubr.f32.mxu0 0.0
        %1515 = vmatmul.mubr.f32.gmra.mxu0 %v1347
        %v1516 = vpop.f32.mrf.mxu0
        %v1517 = vadd.f32 %v1388, %v1516
        %v1518 = vpop.f32.mrf.mxu0
        %1519 = vmatprep.mubr.f32.mxu0 0.0
        %1520 = vmatmul.mubr.f32.gmra.mxu0 %v1348
        %v1521 = vpop.f32.mrf.mxu0
        %v1522 = vadd.f32 %v1388, %v1521
        %v1523 = vpop.f32.mrf.mxu0
        %1524 = vmatprep.mubr.f32.mxu0 0.0
        %1525 = vmatmul.mubr.f32.gmra.mxu0 %v1349
        %v1526 = vpop.f32.mrf.mxu0
        %v1527 = vadd.f32 %v1388, %v1526
        %v1528 = vpop.f32.mrf.mxu0
        %1529 = vmatprep.mubr.f32.mxu0 0.0
        %1530 = vmatmul.mubr.f32.gmra.mxu0 %v1350
        %v1531 = vpop.f32.mrf.mxu0
        %v1532 = vadd.f32 %v1388, %v1531
        %v1533 = vpop.f32.mrf.mxu0
        %1534 = vdwg.mxu0
        %vm1535 = vcmask 130048
        %1536 = vst.msk [vmem:[%s682 + $0x10] sm:$0xff] %vm1535, %v1457
        %1537 = vst.msk [vmem:[%s682 + $0x28] sm:$0xff] %vm1535, %v1462
        %1538 = vst.msk [vmem:[%s682 + $0x40] sm:$0xff] %vm1535, %v1467
        %1539 = vst.msk [vmem:[%s682 + $0x58] sm:$0xff] %vm1535, %v1472
        %1540 = vst.msk [vmem:[%s682 + $0x70] sm:$0xff] %vm1535, %v1477
        %1541 = vst.msk [vmem:[%s682 + $0x88] sm:$0xff] %vm1535, %v1482
        %1542 = vst.msk [vmem:[%s682 + $0xa0] sm:$0xff] %vm1535, %v1487
        %1543 = vst.msk [vmem:[%s682 + $0xb8] sm:$0xff] %vm1535, %v1492
        %1544 = vst.msk [vmem:[%s682 + $0xd0] sm:$0xff] %vm1535, %v1497
        %1545 = vst.msk [vmem:[%s682 + $0xe8] sm:$0xff] %vm1535, %v1502
        %1546 = vst.msk [vmem:[%s682 + $0x100] sm:$0xff] %vm1535, %v1507
        %1547 = vst.msk [vmem:[%s682 + $0x118] sm:$0xff] %vm1535, %v1512
        %1548 = vst.msk [vmem:[%s682 + $0x130] sm:$0xff] %vm1535, %v1517
        %1549 = vst.msk [vmem:[%s682 + $0x148] sm:$0xff] %vm1535, %v1522
        %1550 = vst.msk [vmem:[%s682 + $0x160] sm:$0xff] %vm1535, %v1527
        %1551 = vst.msk [vmem:[%s682 + $0x178] sm:$0xff] %vm1535, %v1532
        %v1552 = vld [vmem:[#allocation11] sm:$0xff]
        %v1553 = vld [vmem:[#allocation11 + $0x8] sm:$0xff]
        %v1554 = vld [vmem:[#allocation11 + $0x10] sm:$0xff]
        %v1555 = vld [vmem:[#allocation11 + $0x18] sm:$0xff]
        %v1556 = vld [vmem:[#allocation11 + $0x20] sm:$0xff]
        %v1557 = vld [vmem:[#allocation11 + $0x28] sm:$0xff]
        %v1558 = vld [vmem:[#allocation11 + $0x30] sm:$0xff]
        %v1559 = vld [vmem:[#allocation11 + $0x38] sm:$0xff]
        %v1560 = vld [vmem:[#allocation11 + $0x40] sm:$0xff]
        %v1561 = vld [vmem:[#allocation11 + $0x48] sm:$0xff]
        %v1562 = vld [vmem:[#allocation11 + $0x50] sm:$0xff]
        %v1563 = vld [vmem:[#allocation11 + $0x58] sm:$0xff]
        %v1564 = vld [vmem:[#allocation11 + $0x60] sm:$0xff]
        %v1565 = vld [vmem:[#allocation11 + $0x68] sm:$0xff]
        %v1566 = vld [vmem:[#allocation11 + $0x70] sm:$0xff]
        %v1567 = vld [vmem:[#allocation11 + $0x78] sm:$0xff]
        %v1568 = vld [vmem:[%s10] sm:$0x1]
        %v1570 = vlaneseq
        %v1571 = vshrl.u32 %v1570, 7
        %v1572 = vsub.s32 0, %v1571
        %v1573 = vrot.slane %v1568, %v1572
        %1575 = vmatprep.subr.mxu0 0.0
        %1576 = vmatpush1.msra.mxu0 %v1567
        %1577 = vmatprep.subr.mxu0 0.0
        %1578 = vmatpush1.msra.mxu0 %v1566
        %1579 = vmatprep.subr.mxu0 0.0
        %1580 = vmatpush1.msra.mxu0 %v1565
        %1581 = vmatprep.subr.mxu0 0.0
        %1582 = vmatpush1.msra.mxu0 %v1564
        %1583 = vmatprep.subr.mxu0 0.0
        %1584 = vmatpush1.msra.mxu0 %v1563
        %1585 = vmatprep.subr.mxu0 0.0
        %1586 = vmatpush1.msra.mxu0 %v1562
        %1587 = vmatprep.subr.mxu0 0.0
        %1588 = vmatpush1.msra.mxu0 %v1561
        %1589 = vmatprep.subr.mxu0 0.0
        %1590 = vmatpush1.msra.mxu0 %v1560
        %1591 = vmatprep.subr.mxu0 0.0
        %1592 = vmatpush1.msra.mxu0 %v1559
        %1593 = vmatprep.subr.mxu0 0.0
        %1594 = vmatpush1.msra.mxu0 %v1558
        %1595 = vmatprep.subr.mxu0 0.0
        %1596 = vmatpush1.msra.mxu0 %v1557
        %1597 = vmatprep.subr.mxu0 0.0
        %1598 = vmatpush1.msra.mxu0 %v1556
        %1599 = vmatprep.subr.mxu0 0.0
        %1600 = vmatpush1.msra.mxu0 %v1555
        %1601 = vmatprep.subr.mxu0 0.0
        %1602 = vmatpush1.msra.mxu0 %v1554
        %1603 = vmatprep.subr.mxu0 0.0
        %1604 = vmatpush1.msra.mxu0 %v1553
        %1605 = vmatprep.subr.mxu0 0.0
        %1606 = vmatpush1.msra.mxu0 %v1552
        %1607 = vmatprep.subr.mxu0 0.0
        %1608 = vmatpush2.msra.mxu0 0.0
        %1609 = vmatprep.subr.mxu0 0.0
        %1610 = vmatpush2.msra.mxu0 0.0
        %1611 = vmatprep.subr.mxu0 0.0
        %1612 = vmatpush2.msra.mxu0 0.0
        %1613 = vmatprep.subr.mxu0 0.0
        %1614 = vmatpush2.msra.mxu0 0.0
        %1615 = vmatprep.subr.mxu0 0.0
        %1616 = vmatpush2.msra.mxu0 0.0
        %1617 = vmatprep.subr.mxu0 0.0
        %1618 = vmatpush2.msra.mxu0 0.0
        %1619 = vmatprep.subr.mxu0 0.0
        %1620 = vmatpush2.msra.mxu0 0.0
        %1621 = vmatprep.subr.mxu0 0.0
        %1622 = vmatpush2.msra.mxu0 0.0
        %1623 = vmatprep.subr.mxu0 0.0
        %1624 = vmatpush2.msra.mxu0 0.0
        %1625 = vmatprep.subr.mxu0 0.0
        %1626 = vmatpush2.msra.mxu0 0.0
        %1627 = vmatprep.subr.mxu0 0.0
        %1628 = vmatpush2.msra.mxu0 0.0
        %1629 = vmatprep.subr.mxu0 0.0
        %1630 = vmatpush2.msra.mxu0 0.0
        %1631 = vmatprep.subr.mxu0 0.0
        %1632 = vmatpush2.msra.mxu0 0.0
        %1633 = vmatprep.subr.mxu0 0.0
        %1634 = vmatpush2.msra.mxu0 0.0
        %1635 = vmatprep.subr.mxu0 0.0
        %1636 = vmatpush2.msra.mxu0 0.0
        %1637 = vmatprep.subr.mxu0 0.0
        %1638 = vmatpush2.msra.mxu0 0.0
        %1639 = vmatprep.mubr.f32.mxu0 0.0
        %1640 = vmatmul.mubr.f32.gmra.mxu0 %v1457
        %v1641 = vpop.f32.mrf.mxu0
        %v1642 = vadd.f32 %v1573, %v1641
        %v1643 = vpop.f32.mrf.mxu0
        %1644 = vmatprep.mubr.f32.mxu0 0.0
        %1645 = vmatmul.mubr.f32.gmra.mxu0 %v1462
        %v1646 = vpop.f32.mrf.mxu0
        %v1647 = vadd.f32 %v1573, %v1646
        %v1648 = vpop.f32.mrf.mxu0
        %1649 = vmatprep.mubr.f32.mxu0 0.0
        %1650 = vmatmul.mubr.f32.gmra.mxu0 %v1467
        %v1651 = vpop.f32.mrf.mxu0
        %v1652 = vadd.f32 %v1573, %v1651
        %v1653 = vpop.f32.mrf.mxu0
        %1654 = vmatprep.mubr.f32.mxu0 0.0
        %1655 = vmatmul.mubr.f32.gmra.mxu0 %v1472
        %v1656 = vpop.f32.mrf.mxu0
        %v1657 = vadd.f32 %v1573, %v1656
        %v1658 = vpop.f32.mrf.mxu0
        %1659 = vmatprep.mubr.f32.mxu0 0.0
        %1660 = vmatmul.mubr.f32.gmra.mxu0 %v1477
        %v1661 = vpop.f32.mrf.mxu0
        %v1662 = vadd.f32 %v1573, %v1661
        %v1663 = vpop.f32.mrf.mxu0
        %1664 = vmatprep.mubr.f32.mxu0 0.0
        %1665 = vmatmul.mubr.f32.gmra.mxu0 %v1482
        %v1666 = vpop.f32.mrf.mxu0
        %v1667 = vadd.f32 %v1573, %v1666
        %v1668 = vpop.f32.mrf.mxu0
        %1669 = vmatprep.mubr.f32.mxu0 0.0
        %1670 = vmatmul.mubr.f32.gmra.mxu0 %v1487
        %v1671 = vpop.f32.mrf.mxu0
        %v1672 = vadd.f32 %v1573, %v1671
        %v1673 = vpop.f32.mrf.mxu0
        %1674 = vmatprep.mubr.f32.mxu0 0.0
        %1675 = vmatmul.mubr.f32.gmra.mxu0 %v1492
        %v1676 = vpop.f32.mrf.mxu0
        %v1677 = vadd.f32 %v1573, %v1676
        %v1678 = vpop.f32.mrf.mxu0
        %1679 = vmatprep.mubr.f32.mxu0 0.0
        %1680 = vmatmul.mubr.f32.gmra.mxu0 %v1497
        %v1681 = vpop.f32.mrf.mxu0
        %v1682 = vadd.f32 %v1573, %v1681
        %v1683 = vpop.f32.mrf.mxu0
        %1684 = vmatprep.mubr.f32.mxu0 0.0
        %1685 = vmatmul.mubr.f32.gmra.mxu0 %v1502
        %v1686 = vpop.f32.mrf.mxu0
        %v1687 = vadd.f32 %v1573, %v1686
        %v1688 = vpop.f32.mrf.mxu0
        %1689 = vmatprep.mubr.f32.mxu0 0.0
        %1690 = vmatmul.mubr.f32.gmra.mxu0 %v1507
        %v1691 = vpop.f32.mrf.mxu0
        %v1692 = vadd.f32 %v1573, %v1691
        %v1693 = vpop.f32.mrf.mxu0
        %1694 = vmatprep.mubr.f32.mxu0 0.0
        %1695 = vmatmul.mubr.f32.gmra.mxu0 %v1512
        %v1696 = vpop.f32.mrf.mxu0
        %v1697 = vadd.f32 %v1573, %v1696
        %v1698 = vpop.f32.mrf.mxu0
        %1699 = vmatprep.mubr.f32.mxu0 0.0
        %1700 = vmatmul.mubr.f32.gmra.mxu0 %v1517
        %v1701 = vpop.f32.mrf.mxu0
        %v1702 = vadd.f32 %v1573, %v1701
        %v1703 = vpop.f32.mrf.mxu0
        %1704 = vmatprep.mubr.f32.mxu0 0.0
        %1705 = vmatmul.mubr.f32.gmra.mxu0 %v1522
        %v1706 = vpop.f32.mrf.mxu0
        %v1707 = vadd.f32 %v1573, %v1706
        %v1708 = vpop.f32.mrf.mxu0
        %1709 = vmatprep.mubr.f32.mxu0 0.0
        %1710 = vmatmul.mubr.f32.gmra.mxu0 %v1527
        %v1711 = vpop.f32.mrf.mxu0
        %v1712 = vadd.f32 %v1573, %v1711
        %v1713 = vpop.f32.mrf.mxu0
        %1714 = vmatprep.mubr.f32.mxu0 0.0
        %1715 = vmatmul.mubr.f32.gmra.mxu0 %v1532
        %v1716 = vpop.f32.mrf.mxu0
        %v1717 = vadd.f32 %v1573, %v1716
        %v1718 = vpop.f32.mrf.mxu0
        %1719 = vdwg.mxu0
        %v1720 = vmax.f32 %v1642, 0.0
        %v1721 = vmax.f32 %v1647, 0.0
        %v1722 = vmax.f32 %v1652, 0.0
        %v1723 = vmax.f32 %v1657, 0.0
        %v1724 = vmax.f32 %v1662, 0.0
        %v1725 = vmax.f32 %v1667, 0.0
        %v1726 = vmax.f32 %v1672, 0.0
        %v1727 = vmax.f32 %v1677, 0.0
        %v1728 = vmax.f32 %v1682, 0.0
        %v1729 = vmax.f32 %v1687, 0.0
        %v1730 = vmax.f32 %v1692, 0.0
        %v1731 = vmax.f32 %v1697, 0.0
        %v1732 = vmax.f32 %v1702, 0.0
        %v1733 = vmax.f32 %v1707, 0.0
        %v1734 = vmax.f32 %v1712, 0.0
        %v1735 = vmax.f32 %v1717, 0.0
        %v1736 = vld [vmem:[#allocation13] sm:$0xff]
        %v1737 = vld [vmem:[#allocation13 + $0x8] sm:$0xff]
        %v1738 = vld [vmem:[#allocation13 + $0x10] sm:$0xff]
        %v1739 = vld [vmem:[#allocation13 + $0x18] sm:$0xff]
        %v1740 = vld [vmem:[#allocation13 + $0x20] sm:$0xff]
        %v1741 = vld [vmem:[#allocation13 + $0x28] sm:$0xff]
        %v1742 = vld [vmem:[#allocation13 + $0x30] sm:$0xff]
        %v1743 = vld [vmem:[#allocation13 + $0x38] sm:$0xff]
        %v1744 = vld [vmem:[#allocation13 + $0x40] sm:$0xff]
        %v1745 = vld [vmem:[#allocation13 + $0x48] sm:$0xff]
        %v1746 = vld [vmem:[#allocation13 + $0x50] sm:$0xff]
        %v1747 = vld [vmem:[#allocation13 + $0x58] sm:$0xff]
        %v1748 = vld [vmem:[#allocation13 + $0x60] sm:$0xff]
        %v1749 = vld [vmem:[#allocation13 + $0x68] sm:$0xff]
        %v1750 = vld [vmem:[#allocation13 + $0x70] sm:$0xff]
        %v1751 = vld [vmem:[#allocation13 + $0x78] sm:$0xff]
        %v1752 = vld [vmem:[%s12] sm:$0x1]
        %v1754 = vlaneseq
        %v1755 = vshrl.u32 %v1754, 7
        %v1756 = vsub.s32 0, %v1755
        %v1757 = vrot.slane %v1752, %v1756
        %1759 = vmatprep.subr.mxu0 0.0
        %1760 = vmatpush1.msra.mxu0 %v1751
        %1761 = vmatprep.subr.mxu0 0.0
        %1762 = vmatpush1.msra.mxu0 %v1750
        %1763 = vmatprep.subr.mxu0 0.0
        %1764 = vmatpush1.msra.mxu0 %v1749
        %1765 = vmatprep.subr.mxu0 0.0
        %1766 = vmatpush1.msra.mxu0 %v1748
        %1767 = vmatprep.subr.mxu0 0.0
        %1768 = vmatpush1.msra.mxu0 %v1747
        %1769 = vmatprep.subr.mxu0 0.0
        %1770 = vmatpush1.msra.mxu0 %v1746
        %1771 = vmatprep.subr.mxu0 0.0
        %1772 = vmatpush1.msra.mxu0 %v1745
        %1773 = vmatprep.subr.mxu0 0.0
        %1774 = vmatpush1.msra.mxu0 %v1744
        %1775 = vmatprep.subr.mxu0 0.0
        %1776 = vmatpush1.msra.mxu0 %v1743
        %1777 = vmatprep.subr.mxu0 0.0
        %1778 = vmatpush1.msra.mxu0 %v1742
        %1779 = vmatprep.subr.mxu0 0.0
        %1780 = vmatpush1.msra.mxu0 %v1741
        %1781 = vmatprep.subr.mxu0 0.0
        %1782 = vmatpush1.msra.mxu0 %v1740
        %1783 = vmatprep.subr.mxu0 0.0
        %1784 = vmatpush1.msra.mxu0 %v1739
        %1785 = vmatprep.subr.mxu0 0.0
        %1786 = vmatpush1.msra.mxu0 %v1738
        %1787 = vmatprep.subr.mxu0 0.0
        %1788 = vmatpush1.msra.mxu0 %v1737
        %1789 = vmatprep.subr.mxu0 0.0
        %1790 = vmatpush1.msra.mxu0 %v1736
        %1791 = vmatprep.subr.mxu0 0.0
        %1792 = vmatpush2.msra.mxu0 0.0
        %1793 = vmatprep.subr.mxu0 0.0
        %1794 = vmatpush2.msra.mxu0 0.0
        %1795 = vmatprep.subr.mxu0 0.0
        %1796 = vmatpush2.msra.mxu0 0.0
        %1797 = vmatprep.subr.mxu0 0.0
        %1798 = vmatpush2.msra.mxu0 0.0
        %1799 = vmatprep.subr.mxu0 0.0
        %1800 = vmatpush2.msra.mxu0 0.0
        %1801 = vmatprep.subr.mxu0 0.0
        %1802 = vmatpush2.msra.mxu0 0.0
        %1803 = vmatprep.subr.mxu0 0.0
        %1804 = vmatpush2.msra.mxu0 0.0
        %1805 = vmatprep.subr.mxu0 0.0
        %1806 = vmatpush2.msra.mxu0 0.0
        %1807 = vmatprep.subr.mxu0 0.0
        %1808 = vmatpush2.msra.mxu0 0.0
        %1809 = vmatprep.subr.mxu0 0.0
        %1810 = vmatpush2.msra.mxu0 0.0
        %1811 = vmatprep.subr.mxu0 0.0
        %1812 = vmatpush2.msra.mxu0 0.0
        %1813 = vmatprep.subr.mxu0 0.0
        %1814 = vmatpush2.msra.mxu0 0.0
        %1815 = vmatprep.subr.mxu0 0.0
        %1816 = vmatpush2.msra.mxu0 0.0
        %1817 = vmatprep.subr.mxu0 0.0
        %1818 = vmatpush2.msra.mxu0 0.0
        %1819 = vmatprep.subr.mxu0 0.0
        %1820 = vmatpush2.msra.mxu0 0.0
        %1821 = vmatprep.subr.mxu0 0.0
        %1822 = vmatpush2.msra.mxu0 0.0
        %1823 = vmatprep.mubr.f32.mxu0 0.0
        %1824 = vmatmul.mubr.f32.gmra.mxu0 %v1720
        %v1825 = vpop.f32.mrf.mxu0
        %v1826 = vadd.f32 %v1757, %v1825
        %v1827 = vpop.f32.mrf.mxu0
        %1828 = vmatprep.mubr.f32.mxu0 0.0
        %1829 = vmatmul.mubr.f32.gmra.mxu0 %v1721
        %v1830 = vpop.f32.mrf.mxu0
        %v1831 = vadd.f32 %v1757, %v1830
        %v1832 = vpop.f32.mrf.mxu0
        %1833 = vmatprep.mubr.f32.mxu0 0.0
        %1834 = vmatmul.mubr.f32.gmra.mxu0 %v1722
        %v1835 = vpop.f32.mrf.mxu0
        %v1836 = vadd.f32 %v1757, %v1835
        %v1837 = vpop.f32.mrf.mxu0
        %1838 = vmatprep.mubr.f32.mxu0 0.0
        %1839 = vmatmul.mubr.f32.gmra.mxu0 %v1723
        %v1840 = vpop.f32.mrf.mxu0
        %v1841 = vadd.f32 %v1757, %v1840
        %v1842 = vpop.f32.mrf.mxu0
        %1843 = vmatprep.mubr.f32.mxu0 0.0
        %1844 = vmatmul.mubr.f32.gmra.mxu0 %v1724
        %v1845 = vpop.f32.mrf.mxu0
        %v1846 = vadd.f32 %v1757, %v1845
        %v1847 = vpop.f32.mrf.mxu0
        %1848 = vmatprep.mubr.f32.mxu0 0.0
        %1849 = vmatmul.mubr.f32.gmra.mxu0 %v1725
        %v1850 = vpop.f32.mrf.mxu0
        %v1851 = vadd.f32 %v1757, %v1850
        %v1852 = vpop.f32.mrf.mxu0
        %1853 = vmatprep.mubr.f32.mxu0 0.0
        %1854 = vmatmul.mubr.f32.gmra.mxu0 %v1726
        %v1855 = vpop.f32.mrf.mxu0
        %v1856 = vadd.f32 %v1757, %v1855
        %v1857 = vpop.f32.mrf.mxu0
        %1858 = vmatprep.mubr.f32.mxu0 0.0
        %1859 = vmatmul.mubr.f32.gmra.mxu0 %v1727
        %v1860 = vpop.f32.mrf.mxu0
        %v1861 = vadd.f32 %v1757, %v1860
        %v1862 = vpop.f32.mrf.mxu0
        %1863 = vmatprep.mubr.f32.mxu0 0.0
        %1864 = vmatmul.mubr.f32.gmra.mxu0 %v1728
        %v1865 = vpop.f32.mrf.mxu0
        %v1866 = vadd.f32 %v1757, %v1865
        %v1867 = vpop.f32.mrf.mxu0
        %1868 = vmatprep.mubr.f32.mxu0 0.0
        %1869 = vmatmul.mubr.f32.gmra.mxu0 %v1729
        %v1870 = vpop.f32.mrf.mxu0
        %v1871 = vadd.f32 %v1757, %v1870
        %v1872 = vpop.f32.mrf.mxu0
        %1873 = vmatprep.mubr.f32.mxu0 0.0
        %1874 = vmatmul.mubr.f32.gmra.mxu0 %v1730
        %v1875 = vpop.f32.mrf.mxu0
        %v1876 = vadd.f32 %v1757, %v1875
        %v1877 = vpop.f32.mrf.mxu0
        %1878 = vmatprep.mubr.f32.mxu0 0.0
        %1879 = vmatmul.mubr.f32.gmra.mxu0 %v1731
        %v1880 = vpop.f32.mrf.mxu0
        %v1881 = vadd.f32 %v1757, %v1880
        %v1882 = vpop.f32.mrf.mxu0
        %1883 = vmatprep.mubr.f32.mxu0 0.0
        %1884 = vmatmul.mubr.f32.gmra.mxu0 %v1732
        %v1885 = vpop.f32.mrf.mxu0
        %v1886 = vadd.f32 %v1757, %v1885
        %v1887 = vpop.f32.mrf.mxu0
        %1888 = vmatprep.mubr.f32.mxu0 0.0
        %1889 = vmatmul.mubr.f32.gmra.mxu0 %v1733
        %v1890 = vpop.f32.mrf.mxu0
        %v1891 = vadd.f32 %v1757, %v1890
        %v1892 = vpop.f32.mrf.mxu0
        %1893 = vmatprep.mubr.f32.mxu0 0.0
        %1894 = vmatmul.mubr.f32.gmra.mxu0 %v1734
        %v1895 = vpop.f32.mrf.mxu0
        %v1896 = vadd.f32 %v1757, %v1895
        %v1897 = vpop.f32.mrf.mxu0
        %1898 = vmatprep.mubr.f32.mxu0 0.0
        %1899 = vmatmul.mubr.f32.gmra.mxu0 %v1735
        %v1900 = vpop.f32.mrf.mxu0
        %v1901 = vadd.f32 %v1757, %v1900
        %v1902 = vpop.f32.mrf.mxu0
        %1903 = vdwg.mxu0
        %v1904 = vmax.f32 %v1826, 0.0
        %v1905 = vmax.f32 %v1831, 0.0
        %v1906 = vmax.f32 %v1836, 0.0
        %v1907 = vmax.f32 %v1841, 0.0
        %v1908 = vmax.f32 %v1846, 0.0
        %v1909 = vmax.f32 %v1851, 0.0
        %v1910 = vmax.f32 %v1856, 0.0
        %v1911 = vmax.f32 %v1861, 0.0
        %v1912 = vmax.f32 %v1866, 0.0
        %v1913 = vmax.f32 %v1871, 0.0
        %v1914 = vmax.f32 %v1876, 0.0
        %v1915 = vmax.f32 %v1881, 0.0
        %v1916 = vmax.f32 %v1886, 0.0
        %v1917 = vmax.f32 %v1891, 0.0
        %v1918 = vmax.f32 %v1896, 0.0
        %v1919 = vmax.f32 %v1901, 0.0
        %v1920 = vld [vmem:[#allocation14] sm:$0xff]
        %v1921 = vld [vmem:[#allocation14 + $0x8] sm:$0xff]
        %v1922 = vld [vmem:[#allocation14 + $0x10] sm:$0xff]
        %v1923 = vld [vmem:[#allocation14 + $0x18] sm:$0xff]
        %v1924 = vld [vmem:[#allocation14 + $0x20] sm:$0xff]
        %v1925 = vld [vmem:[#allocation14 + $0x28] sm:$0xff]
        %v1926 = vld [vmem:[#allocation14 + $0x30] sm:$0xff]
        %v1927 = vld [vmem:[#allocation14 + $0x38] sm:$0xff]
        %v1928 = vld [vmem:[#allocation14 + $0x40] sm:$0xff]
        %v1929 = vld [vmem:[#allocation14 + $0x48] sm:$0xff]
        %v1930 = vld [vmem:[#allocation14 + $0x50] sm:$0xff]
        %v1931 = vld [vmem:[#allocation14 + $0x58] sm:$0xff]
        %v1932 = vld [vmem:[#allocation14 + $0x60] sm:$0xff]
        %v1933 = vld [vmem:[#allocation14 + $0x68] sm:$0xff]
        %v1934 = vld [vmem:[#allocation14 + $0x70] sm:$0xff]
        %v1935 = vld [vmem:[#allocation14 + $0x78] sm:$0xff]
        %v1936 = vld [vmem:[%s14] sm:$0x1]
        %v1938 = vlaneseq
        %v1939 = vshrl.u32 %v1938, 7
        %v1940 = vsub.s32 0, %v1939
        %v1941 = vrot.slane %v1936, %v1940
        %1943 = vmatprep.subr.mxu0 0.0
        %1944 = vmatpush1.msra.mxu0 %v1935
        %1945 = vmatprep.subr.mxu0 0.0
        %1946 = vmatpush1.msra.mxu0 %v1934
        %1947 = vmatprep.subr.mxu0 0.0
        %1948 = vmatpush1.msra.mxu0 %v1933
        %1949 = vmatprep.subr.mxu0 0.0
        %1950 = vmatpush1.msra.mxu0 %v1932
        %1951 = vmatprep.subr.mxu0 0.0
        %1952 = vmatpush1.msra.mxu0 %v1931
        %1953 = vmatprep.subr.mxu0 0.0
        %1954 = vmatpush1.msra.mxu0 %v1930
        %1955 = vmatprep.subr.mxu0 0.0
        %1956 = vmatpush1.msra.mxu0 %v1929
        %1957 = vmatprep.subr.mxu0 0.0
        %1958 = vmatpush1.msra.mxu0 %v1928
        %1959 = vmatprep.subr.mxu0 0.0
        %1960 = vmatpush1.msra.mxu0 %v1927
        %1961 = vmatprep.subr.mxu0 0.0
        %1962 = vmatpush1.msra.mxu0 %v1926
        %1963 = vmatprep.subr.mxu0 0.0
        %1964 = vmatpush1.msra.mxu0 %v1925
        %1965 = vmatprep.subr.mxu0 0.0
        %1966 = vmatpush1.msra.mxu0 %v1924
        %1967 = vmatprep.subr.mxu0 0.0
        %1968 = vmatpush1.msra.mxu0 %v1923
        %1969 = vmatprep.subr.mxu0 0.0
        %1970 = vmatpush1.msra.mxu0 %v1922
        %1971 = vmatprep.subr.mxu0 0.0
        %1972 = vmatpush1.msra.mxu0 %v1921
        %1973 = vmatprep.subr.mxu0 0.0
        %1974 = vmatpush1.msra.mxu0 %v1920
        %1975 = vmatprep.subr.mxu0 0.0
        %1976 = vmatpush2.msra.mxu0 0.0
        %1977 = vmatprep.subr.mxu0 0.0
        %1978 = vmatpush2.msra.mxu0 0.0
        %1979 = vmatprep.subr.mxu0 0.0
        %1980 = vmatpush2.msra.mxu0 0.0
        %1981 = vmatprep.subr.mxu0 0.0
        %1982 = vmatpush2.msra.mxu0 0.0
        %1983 = vmatprep.subr.mxu0 0.0
        %1984 = vmatpush2.msra.mxu0 0.0
        %1985 = vmatprep.subr.mxu0 0.0
        %1986 = vmatpush2.msra.mxu0 0.0
        %1987 = vmatprep.subr.mxu0 0.0
        %1988 = vmatpush2.msra.mxu0 0.0
        %1989 = vmatprep.subr.mxu0 0.0
        %1990 = vmatpush2.msra.mxu0 0.0
        %1991 = vmatprep.subr.mxu0 0.0
        %1992 = vmatpush2.msra.mxu0 0.0
        %1993 = vmatprep.subr.mxu0 0.0
        %1994 = vmatpush2.msra.mxu0 0.0
        %1995 = vmatprep.subr.mxu0 0.0
        %1996 = vmatpush2.msra.mxu0 0.0
        %1997 = vmatprep.subr.mxu0 0.0
        %1998 = vmatpush2.msra.mxu0 0.0
        %1999 = vmatprep.subr.mxu0 0.0
        %2000 = vmatpush2.msra.mxu0 0.0
        %2001 = vmatprep.subr.mxu0 0.0
        %2002 = vmatpush2.msra.mxu0 0.0
        %2003 = vmatprep.subr.mxu0 0.0
        %2004 = vmatpush2.msra.mxu0 0.0
        %2005 = vmatprep.subr.mxu0 0.0
        %2006 = vmatpush2.msra.mxu0 0.0
        %2007 = vmatprep.mubr.f32.mxu0 0.0
        %2008 = vmatmul.mubr.f32.gmra.mxu0 %v1904
        %v2009 = vpop.f32.mrf.mxu0
        %v2010 = vadd.f32 %v1941, %v2009
        %v2011 = vpop.f32.mrf.mxu0
        %2012 = vmatprep.mubr.f32.mxu0 0.0
        %2013 = vmatmul.mubr.f32.gmra.mxu0 %v1905
        %v2014 = vpop.f32.mrf.mxu0
        %v2015 = vadd.f32 %v1941, %v2014
        %v2016 = vpop.f32.mrf.mxu0
        %2017 = vmatprep.mubr.f32.mxu0 0.0
        %2018 = vmatmul.mubr.f32.gmra.mxu0 %v1906
        %v2019 = vpop.f32.mrf.mxu0
        %v2020 = vadd.f32 %v1941, %v2019
        %v2021 = vpop.f32.mrf.mxu0
        %2022 = vmatprep.mubr.f32.mxu0 0.0
        %2023 = vmatmul.mubr.f32.gmra.mxu0 %v1907
        %v2024 = vpop.f32.mrf.mxu0
        %v2025 = vadd.f32 %v1941, %v2024
        %v2026 = vpop.f32.mrf.mxu0
        %2027 = vmatprep.mubr.f32.mxu0 0.0
        %2028 = vmatmul.mubr.f32.gmra.mxu0 %v1908
        %v2029 = vpop.f32.mrf.mxu0
        %v2030 = vadd.f32 %v1941, %v2029
        %v2031 = vpop.f32.mrf.mxu0
        %2032 = vmatprep.mubr.f32.mxu0 0.0
        %2033 = vmatmul.mubr.f32.gmra.mxu0 %v1909
        %v2034 = vpop.f32.mrf.mxu0
        %v2035 = vadd.f32 %v1941, %v2034
        %v2036 = vpop.f32.mrf.mxu0
        %2037 = vmatprep.mubr.f32.mxu0 0.0
        %2038 = vmatmul.mubr.f32.gmra.mxu0 %v1910
        %v2039 = vpop.f32.mrf.mxu0
        %v2040 = vadd.f32 %v1941, %v2039
        %v2041 = vpop.f32.mrf.mxu0
        %2042 = vmatprep.mubr.f32.mxu0 0.0
        %2043 = vmatmul.mubr.f32.gmra.mxu0 %v1911
        %v2044 = vpop.f32.mrf.mxu0
        %v2045 = vadd.f32 %v1941, %v2044
        %v2046 = vpop.f32.mrf.mxu0
        %2047 = vmatprep.mubr.f32.mxu0 0.0
        %2048 = vmatmul.mubr.f32.gmra.mxu0 %v1912
        %v2049 = vpop.f32.mrf.mxu0
        %v2050 = vadd.f32 %v1941, %v2049
        %v2051 = vpop.f32.mrf.mxu0
        %2052 = vmatprep.mubr.f32.mxu0 0.0
        %2053 = vmatmul.mubr.f32.gmra.mxu0 %v1913
        %v2054 = vpop.f32.mrf.mxu0
        %v2055 = vadd.f32 %v1941, %v2054
        %v2056 = vpop.f32.mrf.mxu0
        %2057 = vmatprep.mubr.f32.mxu0 0.0
        %2058 = vmatmul.mubr.f32.gmra.mxu0 %v1914
        %v2059 = vpop.f32.mrf.mxu0
        %v2060 = vadd.f32 %v1941, %v2059
        %v2061 = vpop.f32.mrf.mxu0
        %2062 = vmatprep.mubr.f32.mxu0 0.0
        %2063 = vmatmul.mubr.f32.gmra.mxu0 %v1915
        %v2064 = vpop.f32.mrf.mxu0
        %v2065 = vadd.f32 %v1941, %v2064
        %v2066 = vpop.f32.mrf.mxu0
        %2067 = vmatprep.mubr.f32.mxu0 0.0
        %2068 = vmatmul.mubr.f32.gmra.mxu0 %v1916
        %v2069 = vpop.f32.mrf.mxu0
        %v2070 = vadd.f32 %v1941, %v2069
        %v2071 = vpop.f32.mrf.mxu0
        %2072 = vmatprep.mubr.f32.mxu0 0.0
        %2073 = vmatmul.mubr.f32.gmra.mxu0 %v1917
        %v2074 = vpop.f32.mrf.mxu0
        %v2075 = vadd.f32 %v1941, %v2074
        %v2076 = vpop.f32.mrf.mxu0
        %2077 = vmatprep.mubr.f32.mxu0 0.0
        %2078 = vmatmul.mubr.f32.gmra.mxu0 %v1918
        %v2079 = vpop.f32.mrf.mxu0
        %v2080 = vadd.f32 %v1941, %v2079
        %v2081 = vpop.f32.mrf.mxu0
        %2082 = vmatprep.mubr.f32.mxu0 0.0
        %2083 = vmatmul.mubr.f32.gmra.mxu0 %v1919
        %v2084 = vpop.f32.mrf.mxu0
        %v2085 = vadd.f32 %v1941, %v2084
        %v2086 = vpop.f32.mrf.mxu0
        %2087 = vdwg.mxu0
        %v2088 = vmax.f32 %v2010, 0.0
        %v2089 = vmax.f32 %v2015, 0.0
        %v2090 = vmax.f32 %v2020, 0.0
        %v2091 = vmax.f32 %v2025, 0.0
        %v2092 = vmax.f32 %v2030, 0.0
        %v2093 = vmax.f32 %v2035, 0.0
        %v2094 = vmax.f32 %v2040, 0.0
        %v2095 = vmax.f32 %v2045, 0.0
        %v2096 = vmax.f32 %v2050, 0.0
        %v2097 = vmax.f32 %v2055, 0.0
        %v2098 = vmax.f32 %v2060, 0.0
        %v2099 = vmax.f32 %v2065, 0.0
        %v2100 = vmax.f32 %v2070, 0.0
        %v2101 = vmax.f32 %v2075, 0.0
        %v2102 = vmax.f32 %v2080, 0.0
        %v2103 = vmax.f32 %v2085, 0.0
        %v2104 = vld [vmem:[#allocation16] sm:$0xff]
        %v2105 = vld [vmem:[#allocation16 + $0x8] sm:$0xff]
        %v2106 = vld [vmem:[#allocation16 + $0x10] sm:$0xff]
        %v2107 = vld [vmem:[#allocation16 + $0x18] sm:$0xff]
        %v2108 = vld [vmem:[#allocation16 + $0x20] sm:$0xff]
        %v2109 = vld [vmem:[#allocation16 + $0x28] sm:$0xff]
        %v2110 = vld [vmem:[#allocation16 + $0x30] sm:$0xff]
        %v2111 = vld [vmem:[#allocation16 + $0x38] sm:$0xff]
        %v2112 = vld [vmem:[#allocation16 + $0x40] sm:$0xff]
        %v2113 = vld [vmem:[#allocation16 + $0x48] sm:$0xff]
        %v2114 = vld [vmem:[#allocation16 + $0x50] sm:$0xff]
        %v2115 = vld [vmem:[#allocation16 + $0x58] sm:$0xff]
        %v2116 = vld [vmem:[#allocation16 + $0x60] sm:$0xff]
        %v2117 = vld [vmem:[#allocation16 + $0x68] sm:$0xff]
        %v2118 = vld [vmem:[#allocation16 + $0x70] sm:$0xff]
        %v2119 = vld [vmem:[#allocation16 + $0x78] sm:$0xff]
        %v2120 = vld [vmem:[%s16] sm:$0x1]
        %v2122 = vlaneseq
        %v2123 = vshrl.u32 %v2122, 7
        %v2124 = vsub.s32 0, %v2123
        %v2125 = vrot.slane %v2120, %v2124
        %2127 = vmatprep.subr.mxu0 0.0
        %2128 = vmatpush1.msra.mxu0 %v2119
        %2129 = vmatprep.subr.mxu0 0.0
        %2130 = vmatpush1.msra.mxu0 %v2118
        %2131 = vmatprep.subr.mxu0 0.0
        %2132 = vmatpush1.msra.mxu0 %v2117
        %2133 = vmatprep.subr.mxu0 0.0
        %2134 = vmatpush1.msra.mxu0 %v2116
        %2135 = vmatprep.subr.mxu0 0.0
        %2136 = vmatpush1.msra.mxu0 %v2115
        %2137 = vmatprep.subr.mxu0 0.0
        %2138 = vmatpush1.msra.mxu0 %v2114
        %2139 = vmatprep.subr.mxu0 0.0
        %2140 = vmatpush1.msra.mxu0 %v2113
        %2141 = vmatprep.subr.mxu0 0.0
        %2142 = vmatpush1.msra.mxu0 %v2112
        %2143 = vmatprep.subr.mxu0 0.0
        %2144 = vmatpush1.msra.mxu0 %v2111
        %2145 = vmatprep.subr.mxu0 0.0
        %2146 = vmatpush1.msra.mxu0 %v2110
        %2147 = vmatprep.subr.mxu0 0.0
        %2148 = vmatpush1.msra.mxu0 %v2109
        %2149 = vmatprep.subr.mxu0 0.0
        %2150 = vmatpush1.msra.mxu0 %v2108
        %2151 = vmatprep.subr.mxu0 0.0
        %2152 = vmatpush1.msra.mxu0 %v2107
        %2153 = vmatprep.subr.mxu0 0.0
        %2154 = vmatpush1.msra.mxu0 %v2106
        %2155 = vmatprep.subr.mxu0 0.0
        %2156 = vmatpush1.msra.mxu0 %v2105
        %2157 = vmatprep.subr.mxu0 0.0
        %2158 = vmatpush1.msra.mxu0 %v2104
        %2159 = vmatprep.subr.mxu0 0.0
        %2160 = vmatpush2.msra.mxu0 0.0
        %2161 = vmatprep.subr.mxu0 0.0
        %2162 = vmatpush2.msra.mxu0 0.0
        %2163 = vmatprep.subr.mxu0 0.0
        %2164 = vmatpush2.msra.mxu0 0.0
        %2165 = vmatprep.subr.mxu0 0.0
        %2166 = vmatpush2.msra.mxu0 0.0
        %2167 = vmatprep.subr.mxu0 0.0
        %2168 = vmatpush2.msra.mxu0 0.0
        %2169 = vmatprep.subr.mxu0 0.0
        %2170 = vmatpush2.msra.mxu0 0.0
        %2171 = vmatprep.subr.mxu0 0.0
        %2172 = vmatpush2.msra.mxu0 0.0
        %2173 = vmatprep.subr.mxu0 0.0
        %2174 = vmatpush2.msra.mxu0 0.0
        %2175 = vmatprep.subr.mxu0 0.0
        %2176 = vmatpush2.msra.mxu0 0.0
        %2177 = vmatprep.subr.mxu0 0.0
        %2178 = vmatpush2.msra.mxu0 0.0
        %2179 = vmatprep.subr.mxu0 0.0
        %2180 = vmatpush2.msra.mxu0 0.0
        %2181 = vmatprep.subr.mxu0 0.0
        %2182 = vmatpush2.msra.mxu0 0.0
        %2183 = vmatprep.subr.mxu0 0.0
        %2184 = vmatpush2.msra.mxu0 0.0
        %2185 = vmatprep.subr.mxu0 0.0
        %2186 = vmatpush2.msra.mxu0 0.0
        %2187 = vmatprep.subr.mxu0 0.0
        %2188 = vmatpush2.msra.mxu0 0.0
        %2189 = vmatprep.subr.mxu0 0.0
        %2190 = vmatpush2.msra.mxu0 0.0
        %2191 = vmatprep.mubr.f32.mxu0 0.0
        %2192 = vmatmul.mubr.f32.gmra.mxu0 %v2088
        %v2193 = vpop.f32.mrf.mxu0
        %v2194 = vadd.f32 %v2125, %v2193
        %v2195 = vpop.f32.mrf.mxu0
        %2196 = vmatprep.mubr.f32.mxu0 0.0
        %2197 = vmatmul.mubr.f32.gmra.mxu0 %v2089
        %v2198 = vpop.f32.mrf.mxu0
        %v2199 = vadd.f32 %v2125, %v2198
        %v2200 = vpop.f32.mrf.mxu0
        %2201 = vmatprep.mubr.f32.mxu0 0.0
        %2202 = vmatmul.mubr.f32.gmra.mxu0 %v2090
        %v2203 = vpop.f32.mrf.mxu0
        %v2204 = vadd.f32 %v2125, %v2203
        %v2205 = vpop.f32.mrf.mxu0
        %2206 = vmatprep.mubr.f32.mxu0 0.0
        %2207 = vmatmul.mubr.f32.gmra.mxu0 %v2091
        %v2208 = vpop.f32.mrf.mxu0
        %v2209 = vadd.f32 %v2125, %v2208
        %v2210 = vpop.f32.mrf.mxu0
        %2211 = vmatprep.mubr.f32.mxu0 0.0
        %2212 = vmatmul.mubr.f32.gmra.mxu0 %v2092
        %v2213 = vpop.f32.mrf.mxu0
        %v2214 = vadd.f32 %v2125, %v2213
        %v2215 = vpop.f32.mrf.mxu0
        %2216 = vmatprep.mubr.f32.mxu0 0.0
        %2217 = vmatmul.mubr.f32.gmra.mxu0 %v2093
        %v2218 = vpop.f32.mrf.mxu0
        %v2219 = vadd.f32 %v2125, %v2218
        %v2220 = vpop.f32.mrf.mxu0
        %2221 = vmatprep.mubr.f32.mxu0 0.0
        %2222 = vmatmul.mubr.f32.gmra.mxu0 %v2094
        %v2223 = vpop.f32.mrf.mxu0
        %v2224 = vadd.f32 %v2125, %v2223
        %v2225 = vpop.f32.mrf.mxu0
        %2226 = vmatprep.mubr.f32.mxu0 0.0
        %2227 = vmatmul.mubr.f32.gmra.mxu0 %v2095
        %v2228 = vpop.f32.mrf.mxu0
        %v2229 = vadd.f32 %v2125, %v2228
        %v2230 = vpop.f32.mrf.mxu0
        %2231 = vmatprep.mubr.f32.mxu0 0.0
        %2232 = vmatmul.mubr.f32.gmra.mxu0 %v2096
        %v2233 = vpop.f32.mrf.mxu0
        %v2234 = vadd.f32 %v2125, %v2233
        %v2235 = vpop.f32.mrf.mxu0
        %2236 = vmatprep.mubr.f32.mxu0 0.0
        %2237 = vmatmul.mubr.f32.gmra.mxu0 %v2097
        %v2238 = vpop.f32.mrf.mxu0
        %v2239 = vadd.f32 %v2125, %v2238
        %v2240 = vpop.f32.mrf.mxu0
        %2241 = vmatprep.mubr.f32.mxu0 0.0
        %2242 = vmatmul.mubr.f32.gmra.mxu0 %v2098
        %v2243 = vpop.f32.mrf.mxu0
        %v2244 = vadd.f32 %v2125, %v2243
        %v2245 = vpop.f32.mrf.mxu0
        %2246 = vmatprep.mubr.f32.mxu0 0.0
        %2247 = vmatmul.mubr.f32.gmra.mxu0 %v2099
        %v2248 = vpop.f32.mrf.mxu0
        %v2249 = vadd.f32 %v2125, %v2248
        %v2250 = vpop.f32.mrf.mxu0
        %2251 = vmatprep.mubr.f32.mxu0 0.0
        %2252 = vmatmul.mubr.f32.gmra.mxu0 %v2100
        %v2253 = vpop.f32.mrf.mxu0
        %v2254 = vadd.f32 %v2125, %v2253
        %v2255 = vpop.f32.mrf.mxu0
        %2256 = vmatprep.mubr.f32.mxu0 0.0
        %2257 = vmatmul.mubr.f32.gmra.mxu0 %v2101
        %v2258 = vpop.f32.mrf.mxu0
        %v2259 = vadd.f32 %v2125, %v2258
        %v2260 = vpop.f32.mrf.mxu0
        %2261 = vmatprep.mubr.f32.mxu0 0.0
        %2262 = vmatmul.mubr.f32.gmra.mxu0 %v2102
        %v2263 = vpop.f32.mrf.mxu0
        %v2264 = vadd.f32 %v2125, %v2263
        %v2265 = vpop.f32.mrf.mxu0
        %2266 = vmatprep.mubr.f32.mxu0 0.0
        %2267 = vmatmul.mubr.f32.gmra.mxu0 %v2103
        %v2268 = vpop.f32.mrf.mxu0
        %v2269 = vadd.f32 %v2125, %v2268
        %v2270 = vpop.f32.mrf.mxu0
        %2271 = vdwg.mxu0
        %2288 = vrot.lane.b32.xlu0 %v2194, 16
        %v2289 = vpop.permute.xlu0 %2288
        %2290 = vrot.lane.b32.xlu0 %v2199, 16
        %v2291 = vpop.permute.xlu0 %2290
        %2292 = vrot.lane.b32.xlu0 %v2204, 16
        %v2293 = vpop.permute.xlu0 %2292
        %2294 = vrot.lane.b32.xlu0 %v2209, 16
        %v2295 = vpop.permute.xlu0 %2294
        %2296 = vrot.lane.b32.xlu0 %v2214, 16
        %v2297 = vpop.permute.xlu0 %2296
        %2298 = vrot.lane.b32.xlu0 %v2219, 16
        %v2299 = vpop.permute.xlu0 %2298
        %2300 = vrot.lane.b32.xlu0 %v2224, 16
        %v2301 = vpop.permute.xlu0 %2300
        %2302 = vrot.lane.b32.xlu0 %v2229, 16
        %v2303 = vpop.permute.xlu0 %2302
        %2304 = vrot.lane.b32.xlu0 %v2234, 16
        %v2305 = vpop.permute.xlu0 %2304
        %2306 = vrot.lane.b32.xlu0 %v2239, 16
        %v2307 = vpop.permute.xlu0 %2306
        %2308 = vrot.lane.b32.xlu0 %v2244, 16
        %v2309 = vpop.permute.xlu0 %2308
        %2310 = vrot.lane.b32.xlu0 %v2249, 16
        %v2311 = vpop.permute.xlu0 %2310
        %2312 = vrot.lane.b32.xlu0 %v2254, 16
        %v2313 = vpop.permute.xlu0 %2312
        %2314 = vrot.lane.b32.xlu0 %v2259, 16
        %v2315 = vpop.permute.xlu0 %2314
        %2316 = vrot.lane.b32.xlu0 %v2264, 16
        %v2317 = vpop.permute.xlu0 %2316
        %2318 = vrot.lane.b32.xlu0 %v2269, 16
        %v2319 = vpop.permute.xlu0 %2318
        %vm2336 = vcmask 392320
        %2337 = vst.msk [vmem:[%s682 + $0x10] sm:$0xff] %vm2336, %v2289
        %2338 = vst.msk [vmem:[%s682 + $0x28] sm:$0xff] %vm2336, %v2291
        %2339 = vst.msk [vmem:[%s682 + $0x40] sm:$0xff] %vm2336, %v2293
        %2340 = vst.msk [vmem:[%s682 + $0x58] sm:$0xff] %vm2336, %v2295
        %2341 = vst.msk [vmem:[%s682 + $0x70] sm:$0xff] %vm2336, %v2297
        %2342 = vst.msk [vmem:[%s682 + $0x88] sm:$0xff] %vm2336, %v2299
        %2343 = vst.msk [vmem:[%s682 + $0xa0] sm:$0xff] %vm2336, %v2301
        %2344 = vst.msk [vmem:[%s682 + $0xb8] sm:$0xff] %vm2336, %v2303
        %2345 = vst.msk [vmem:[%s682 + $0xd0] sm:$0xff] %vm2336, %v2305
        %2346 = vst.msk [vmem:[%s682 + $0xe8] sm:$0xff] %vm2336, %v2307
        %2347 = vst.msk [vmem:[%s682 + $0x100] sm:$0xff] %vm2336, %v2309
        %2348 = vst.msk [vmem:[%s682 + $0x118] sm:$0xff] %vm2336, %v2311
        %2349 = vst.msk [vmem:[%s682 + $0x130] sm:$0xff] %vm2336, %v2313
        %2350 = vst.msk [vmem:[%s682 + $0x148] sm:$0xff] %vm2336, %v2315
        %2351 = vst.msk [vmem:[%s682 + $0x160] sm:$0xff] %vm2336, %v2317
        %2352 = vst.msk [vmem:[%s682 + $0x178] sm:$0xff] %vm2336, %v2319
        %s2353 = sand.u32 %s408, 1
        %s2354 = scalar_lea.sflag [#allocation4], %s2353
        %s2355 = sand.u32 %s408, 1
        %s2356 = smul.addr %s2355, 384
        %s2357 = scalar_lea.vmem [#allocation17], %s2356
        // Predicated region
        $region125: #{tpu_custom_call.1} parent=87 // pred_check
          %p2358 = pneg %p418
        $region126: #{tpu_custom_call.1} parent=87 // pred_check_branch
          %2360 = sbr.rel (%p2358) target = $region128
        $region127: #{tpu_custom_call.1} parent=87 // pred_region
          %s2361 = smul.u32 16, %s38
          %s2363 = ssub.s32 6144, 6144
          %2364 = vsyncadd %s2354, %s2363
          %s2365 = smul.addr %s2361, 3
          %s2366 = smul.addr %s2365, 128
          %s2367 = scalar_lea.hbm %s17, %s2366
          %s2368 = sshll.u32 %s2357, 4
          %s2369 = int_to_ptr.vmem [resolvable:$true] %s2368
          %2374 = dma.vmem_to_hbm [thread:$0]  %s2369, 6144, %s2367, %s2354, 384, 384, 24
        $region128: #{tpu_custom_call.1} parent=87 // pred_fallthru
          _
      $region88: #{tpu_custom_call.1} parent=5 // pred_fallthru
        _
      %p2375 = scmp.le.s32.totalorder 2, %s33
      // Predicated region
      $region129: #{tpu_custom_call.1} parent=5 // pred_check
        %p2376 = pneg %p2375
      $region130: #{tpu_custom_call.1} parent=5 // pred_check_branch
        %2378 = sbr.rel (%p2376) target = $region132
      $region131: #{tpu_custom_call.1} parent=5 // pred_region
        %s2379 = ssub.s32 %s33, 2
        // Predicated region
        $region133: #{tpu_custom_call.1} parent=131 // pred_check
          %p2380 = pneg %p424
        $region134: #{tpu_custom_call.1} parent=131 // pred_check_branch
          %2382 = sbr.rel (%p2380) target = $region136
        $region135: #{tpu_custom_call.1} parent=131 // pred_region
          %s2383 = sand.u32 %s409, 1
          %s2384 = scalar_lea.sflag [#allocation4], %s2383
          %s2385 = sand.u32 %s409, 1
          %s2386 = smul.addr %s2385, 384
          %s2387 = scalar_lea.vmem [#allocation17], %s2386
          %2388 = dma.done %s2384, 6144
        $region136: #{tpu_custom_call.1} parent=131 // pred_fallthru
          _
      $region132: #{tpu_custom_call.1} parent=5 // pred_fallthru
        _
    $region6: #{tpu_custom_call.1} parent=1 // loop_footer
      %s37 = sadd.s32 1, %s33
    $region7: #{tpu_custom_call.1} parent=1 // loop_footer_branch
      %32 = sbr.rel target = $region3
    $region8: #{tpu_custom_call.1} parent=1 // loop_exit
      _
    %2389 = vsyncpa [#allocation3], 1
    %s2390 = scalar_lea.sflag [#allocation3], 1
    %2391 = vsyncpa %s2390, 1
    %2392 = vsyncpa [#allocation6], 1
    %2393 = vsyncpa [#allocation9], 1
    %2394 = vsyncpa [#allocation12], 1
    %2395 = vsyncpa [#allocation15], 1
    %2396 = vsyncpa [#allocation4], 1
    %s2397 = scalar_lea.sflag [#allocation4], 1
    %2398 = vsyncpa %s2397, 1

</llo_original>
